<compile_context>
chip_gen: v5e
topology: v5e:2x2
jax: 0.10.0
libtpu: 0.0.40
codegen_flags: <defaults>
</compile_context>

<pallas_src>
import functools

import jax
import jax.numpy as jnp
from jax.experimental import pallas as pl
from jax.experimental.pallas import tpu as pltpu

K1, K2 = 15, 5
BN_EPS = 1e-5


def conv3l_kernel(x_ref, w1_ref, b1_ref, w2_ref, b2_ref, w3_ref, b3_ref,
                  out_ref, *, seq_len):
    """One grid step over `batch_tile` sequences stacked along the row axis.

    x_ref : (1, M, C_in) bf16, with M = batch_tile * seq_len
    w1_ref: (K1*C_in, 128) bf16  (BN1 scale folded in)
    b1_ref: (1, 128) f32         (conv1 bias + BN1 shift folded)
    w2_ref: (K2*128, 16) bf16    (BN2 scale folded in)
    b2_ref: (1, 16) f32
    w3_ref: (1, 16) f32,  b3_ref: (1, 1) f32
    out_ref: (1, 1, M) f32       lane-dense output row
    """
    M = x_ref.shape[1]
    x = x_ref[0].astype(jnp.float32)                          # (M, C_in)

    # Row position inside each length-L sequence (batches stacked along M).
    # Masking on `pos` implements 'same' zero-padding AND keeps taps from
    # leaking across the boundary between stacked batches.
    pos = jax.lax.broadcasted_iota(jnp.int32, (M, 1), 0) % seq_len

    # One (M, 1) boolean mask per static tap offset, shared between conv1 and
    # conv2 (conv2's offsets are a subset of conv1's).  Since `off` is static,
    # only a single compare is needed per offset.
    mask_cache = {}

    def tap_mask(off):
        if off not in mask_cache:
            if off > 0:
                mask_cache[off] = pos < (seq_len - off)
            else:
                mask_cache[off] = pos >= (-off)
        return mask_cache[off]

    def im2col(h, ksize):
        """Concatenate the ksize shifted / zero-masked taps along lanes."""
        pad = ksize // 2
        cols = []
        for t in range(ksize):                                # static unroll
            off = t - pad
            if off == 0:
                cols.append(h)
                continue
            rolled = pltpu.roll(h, shift=(-off) % M, axis=0)  # XLU sublane roll
            cols.append(jnp.where(tap_mask(off), rolled, 0.0))
        return jnp.concatenate(cols, axis=-1)                 # (M, ksize*channels)

    # ---- conv1 (k=15,'same') + folded BN1 + tanh; dropout(0.3)=identity ----
    a1 = im2col(x, K1).astype(jnp.bfloat16)                   # (M, K1*C_in)
    h1 = jnp.dot(a1, w1_ref[...], preferred_element_type=jnp.float32)
    h1 = jnp.tanh(h1 + b1_ref[...])                           # (M, 128) f32

    # ---- conv2 (k=5,'same') + folded BN2 + tanh ----
    a2 = im2col(h1, K2).astype(jnp.bfloat16)                  # (M, K2*128)
    h2 = jnp.dot(a2, w2_ref[...], preferred_element_type=jnp.float32)
    h2 = jnp.tanh(h2 + b2_ref[...])                           # (M, 16) f32

    # ---- conv3 (1x1 -> 1 channel): contract channels, land M on lanes so the
    # store is lane-dense (no 1-wide masked column stores). ----
    h3 = jnp.einsum('oc,mc->om', w3_ref[...], h2,
                    preferred_element_type=jnp.float32)       # (1, M)
    out_ref[0] = (h3 + b3_ref[...]).astype(out_ref.dtype)


def _pick_batch_tile(batch, seq_len, max_rows=1024):
    """Largest divisor of `batch` keeping batch_tile*seq_len <= max_rows."""
    bt = 1
    for d in range(1, batch + 1):
        if batch % d == 0 and d * seq_len <= max_rows:
            bt = d
    return bt


def conv_3l_forward(x, folded, *, batch_tile=None):
    """x: (B, L, embd_dim) float32 -> (B, L, 1) float32 (eval-mode forward)."""
    w1f, b1, w2f, b2, w3r, b3 = folded
    B, L, C = x.shape
    if batch_tile is None:
        batch_tile = _pick_batch_tile(B, L)
    assert B % batch_tile == 0
    G = B // batch_tile
    M = batch_tile * L

    # Free (row-major) reshape: stack batch_tile sequences along the row axis,
    # and halve input DMA bytes by feeding the matmul operand as bf16.
    xg = x.reshape(G, M, C).astype(jnp.bfloat16)

    out = pl.pallas_call(
        functools.partial(conv3l_kernel, seq_len=L),
        out_shape=jax.ShapeDtypeStruct((G, 1, M), jnp.float32),
        grid_spec=pltpu.PrefetchScalarGridSpec(
            num_scalar_prefetch=0,
            grid=(G,),
            in_specs=[
                pl.BlockSpec((1, M, C), lambda g: (g, 0, 0)),
                pl.BlockSpec(w1f.shape, lambda g: (0, 0)),
                pl.BlockSpec(b1.shape, lambda g: (0, 0)),
                pl.BlockSpec(w2f.shape, lambda g: (0, 0)),
                pl.BlockSpec(b2.shape, lambda g: (0, 0)),
                pl.BlockSpec(w3r.shape, lambda g: (0, 0)),
                pl.BlockSpec(b3.shape, lambda g: (0, 0)),
            ],
            out_specs=pl.BlockSpec((1, 1, M), lambda g: (g, 0, 0)),
        ),
        compiler_params=pltpu.CompilerParams(
            dimension_semantics=("parallel",)),   # shard batch over v7x's 2 TCs
    )(xg, w1f, b1, w2f, b2, w3r, b3)

    # Lane-dense (G, 1, M) slab back to the module's (B, L, 1) layout (free).
    return out.reshape(B, L, 1)


def make_params(key, embd_dim):
    """Deterministic synthetic parameters matching CONV_3L's shapes."""
    ks = jax.random.split(key, 12)
    # Conv weights stored as (k, C_in, C_out); biases as (C_out,)
    w1 = jax.random.normal(ks[0], (K1, embd_dim, 128), jnp.float32) * 0.05
    cb1 = jax.random.normal(ks[1], (128,), jnp.float32) * 0.05
    w2 = jax.random.normal(ks[2], (K2, 128, 16), jnp.float32) * 0.05
    cb2 = jax.random.normal(ks[3], (16,), jnp.float32) * 0.05
    w3 = jax.random.normal(ks[4], (1, 16, 1), jnp.float32) * 0.05
    cb3 = jax.random.normal(ks[5], (1,), jnp.float32) * 0.05
    # BatchNorm (eval-mode running stats)
    g1 = 1.0 + 0.1 * jax.random.normal(ks[6], (128,), jnp.float32)
    be1 = 0.1 * jax.random.normal(ks[7], (128,), jnp.float32)
    m1 = 0.1 * jax.random.normal(ks[8], (128,), jnp.float32)
    v1 = jax.random.uniform(ks[9], (128,), jnp.float32, 0.5, 1.5)
    g2 = 1.0 + 0.1 * jax.random.normal(ks[10], (16,), jnp.float32)
    be2 = 0.1 * jax.random.normal(ks[11], (16,), jnp.float32)
    m2 = 0.05 * jnp.arange(16, dtype=jnp.float32) - 0.4
    v2 = 1.0 + 0.03 * jnp.arange(16, dtype=jnp.float32)
    raw = dict(w1=w1, cb1=cb1, w2=w2, cb2=cb2, w3=w3, cb3=cb3,
               g1=g1, be1=be1, m1=m1, v1=v1, g2=g2, be2=be2, m2=m2, v2=v2)

    # Fold eval-mode BN: scale into the conv weights (then flatten taps for the
    # im2col matmul, bf16 operands), conv bias + BN shift into an fp32 bias.
    s1 = g1 / jnp.sqrt(v1 + BN_EPS)
    b1 = (cb1 - m1) * s1 + be1
    s2 = g2 / jnp.sqrt(v2 + BN_EPS)
    b2 = (cb2 - m2) * s2 + be2
    w1f = (w1 * s1[None, None, :]).reshape(K1 * embd_dim, 128).astype(jnp.bfloat16)
    w2f = (w2 * s2[None, None, :]).reshape(K2 * 128, 16).astype(jnp.bfloat16)
    folded = (w1f, b1.reshape(1, 128),
              w2f, b2.reshape(1, 16),
              w3.reshape(1, 16), cb3.reshape(1, 1))
    return raw, folded


def ref_forward(x, raw):
    """Pure-JAX fp32 reference (lax conv, eval-mode BN) for validation."""
    def conv1d(x_ncl, w_kio, bias):
        w = jnp.transpose(w_kio, (2, 1, 0))                 # (O, I, K)
        y = jax.lax.conv_general_dilated(
            x_ncl, w, (1,), 'SAME', dimension_numbers=('NCH', 'OIH', 'NCH'))
        return y + bias[None, :, None]

    def bn(x_ncl, g, b, m, v):
        return (x_ncl - m[None, :, None]) / jnp.sqrt(v[None, :, None] + BN_EPS) \
               * g[None, :, None] + b[None, :, None]

    xc = jnp.transpose(x, (0, 2, 1))                        # (B, C, L)
    h = jnp.tanh(bn(conv1d(xc, raw['w1'], raw['cb1']),
                    raw['g1'], raw['be1'], raw['m1'], raw['v1']))
    h = jnp.tanh(bn(conv1d(h, raw['w2'], raw['cb2']),
                    raw['g2'], raw['be2'], raw['m2'], raw['v2']))
    h = conv1d(h, raw['w3'], raw['cb3'])
    return jnp.transpose(h, (0, 2, 1))                      # (B, L, 1)


if __name__ == "__main__":
    B, L, EMBD = 2, 16, 32
    key = jax.random.PRNGKey(0)
    kx, kp = jax.random.split(key)
    x = jax.random.normal(kx, (B, L, EMBD), jnp.float32)
    raw, folded = make_params(kp, EMBD)

    out = jax.block_until_ready(conv_3l_forward(x, folded))
    ref = jax.block_until_ready(ref_forward(x, raw))

    assert out.shape == (B, L, 1)
    # bf16 matmul operands (fp32 accumulation) => ~1e-2-level agreement vs the
    # fp32 reference, so tolerances are loosened accordingly.
    err = float(jnp.max(jnp.abs(out - ref)))
    assert jnp.allclose(out, ref, rtol=2e-2, atol=2e-2), f"max abs err {err}"

    print("KERNEL_OK")
</pallas_src>

<mosaic_0001>
module attributes {stable_mosaic.version = 11 : i64} {
  func.func @conv3l_kernel(%arg0: i32, %arg1: memref<1x32x32xbf16, #tpu.memory_space<vmem>>, %arg2: memref<480x128xbf16, #tpu.memory_space<vmem>>, %arg3: memref<1x128xf32, #tpu.memory_space<vmem>>, %arg4: memref<640x16xbf16, #tpu.memory_space<vmem>>, %arg5: memref<1x16xf32, #tpu.memory_space<vmem>>, %arg6: memref<1x16xf32, #tpu.memory_space<vmem>>, %arg7: memref<1x1xf32, #tpu.memory_space<vmem>>, %arg8: memref<1x1x32xf32, #tpu.memory_space<vmem>>) attributes {dimension_semantics = [#tpu.dimension_semantics<parallel>], iteration_bounds = array<i64: 1>, scalar_prefetch = 0 : i64, scratch_operands = 0 : i64, tpu.core_type = #tpu.core_type<tc>, window_params = [{transform_indices = @transform_0, window_bounds = array<i64: 1, 32, 32>}, {pipeline_mode = #tpu.pipeline_mode<synchronous>, transform_indices = @transform_1, window_bounds = array<i64: 480, 128>}, {pipeline_mode = #tpu.pipeline_mode<synchronous>, transform_indices = @transform_2, window_bounds = array<i64: 1, 128>}, {pipeline_mode = #tpu.pipeline_mode<synchronous>, transform_indices = @transform_3, window_bounds = array<i64: 640, 16>}, {pipeline_mode = #tpu.pipeline_mode<synchronous>, transform_indices = @transform_4, window_bounds = array<i64: 1, 16>}, {pipeline_mode = #tpu.pipeline_mode<synchronous>, transform_indices = @transform_5, window_bounds = array<i64: 1, 16>}, {pipeline_mode = #tpu.pipeline_mode<synchronous>, transform_indices = @transform_6, window_bounds = array<i64: 1, 1>}, {transform_indices = @transform_7, window_bounds = array<i64: 1, 1, 32>}]} {
    %c0 = arith.constant 0 : index
    %c0_0 = arith.constant 0 : index
    %c0_1 = arith.constant 0 : index
    %0 = vector.load %arg1[%c0, %c0_0, %c0_1] : memref<1x32x32xbf16, #tpu.memory_space<vmem>>, vector<1x32x32xbf16>
    %1 = vector.shape_cast %0 : vector<1x32x32xbf16> to vector<32x32xbf16>
    %2 = arith.extf %1 : vector<32x32xbf16> to vector<32x32xf32>
    %3 = tpu.iota {dimensions = array<i32: 0>} : vector<32x1xi32>
    %c16_i32 = arith.constant 16 : i32
    %c0_i32 = arith.constant 0 : i32
    %4 = arith.cmpi eq, %c16_i32, %c0_i32 : i32
    %c1_i32 = arith.constant 1 : i32
    %5 = arith.select %4, %c1_i32, %c16_i32 : i32
    %6 = vector.broadcast %5 : i32 to vector<32x1xi32>
    %7 = arith.remsi %3, %6 : vector<32x1xi32>
    %c0_i32_2 = arith.constant 0 : i32
    %8 = vector.broadcast %c0_i32_2 : i32 to vector<32x1xi32>
    %9 = arith.cmpi ne, %7, %8 : vector<32x1xi32>
    %c0_i32_3 = arith.constant 0 : i32
    %10 = vector.broadcast %c0_i32_3 : i32 to vector<32x1xi32>
    %11 = arith.cmpi slt, %7, %10 : vector<32x1xi32>
    %c0_i32_4 = arith.constant 0 : i32
    %12 = arith.cmpi slt, %5, %c0_i32_4 : i32
    %13 = vector.broadcast %12 : i1 to vector<32x1xi1>
    %14 = vector.broadcast %13 : vector<32x1xi1> to vector<32x1xi1>
    %15 = arith.xori %11, %14 : vector<32x1xi1>
    %16 = arith.andi %15, %9 : vector<32x1xi1>
    %17 = vector.broadcast %5 : i32 to vector<32x1xi32>
    %18 = arith.addi %7, %17 : vector<32x1xi32>
    %19 = arith.select %16, %18, %7 : vector<32x1xi1>, vector<32x1xi32>
    %c7_i32 = arith.constant 7 : i32
    %20 = tpu.dynamic_rotate %2 by %c7_i32 dim 0 : vector<32x32xf32>, i32 -> vector<32x32xf32>
    %c7_i32_5 = arith.constant 7 : i32
    %21 = vector.broadcast %c7_i32_5 : i32 to vector<32x1xi32>
    %22 = arith.cmpi sge, %19, %21 : vector<32x1xi32>
    %cst = arith.constant 0.000000e+00 : f32
    %23 = vector.shape_cast %22 : vector<32x1xi1> to vector<32x1xi1>
    %24 = vector.broadcast %23 : vector<32x1xi1> to vector<32x32xi1>
    %25 = vector.broadcast %cst : f32 to vector<32x32xf32>
    %26 = arith.select %24, %20, %25 : vector<32x32xi1>, vector<32x32xf32>
    %c6_i32 = arith.constant 6 : i32
    %27 = tpu.dynamic_rotate %2 by %c6_i32 dim 0 : vector<32x32xf32>, i32 -> vector<32x32xf32>
    %c6_i32_6 = arith.constant 6 : i32
    %28 = vector.broadcast %c6_i32_6 : i32 to vector<32x1xi32>
    %29 = arith.cmpi sge, %19, %28 : vector<32x1xi32>
    %cst_7 = arith.constant 0.000000e+00 : f32
    %30 = vector.shape_cast %29 : vector<32x1xi1> to vector<32x1xi1>
    %31 = vector.broadcast %30 : vector<32x1xi1> to vector<32x32xi1>
    %32 = vector.broadcast %cst_7 : f32 to vector<32x32xf32>
    %33 = arith.select %31, %27, %32 : vector<32x32xi1>, vector<32x32xf32>
    %c5_i32 = arith.constant 5 : i32
    %34 = tpu.dynamic_rotate %2 by %c5_i32 dim 0 : vector<32x32xf32>, i32 -> vector<32x32xf32>
    %c5_i32_8 = arith.constant 5 : i32
    %35 = vector.broadcast %c5_i32_8 : i32 to vector<32x1xi32>
    %36 = arith.cmpi sge, %19, %35 : vector<32x1xi32>
    %cst_9 = arith.constant 0.000000e+00 : f32
    %37 = vector.shape_cast %36 : vector<32x1xi1> to vector<32x1xi1>
    %38 = vector.broadcast %37 : vector<32x1xi1> to vector<32x32xi1>
    %39 = vector.broadcast %cst_9 : f32 to vector<32x32xf32>
    %40 = arith.select %38, %34, %39 : vector<32x32xi1>, vector<32x32xf32>
    %c4_i32 = arith.constant 4 : i32
    %41 = tpu.dynamic_rotate %2 by %c4_i32 dim 0 : vector<32x32xf32>, i32 -> vector<32x32xf32>
    %c4_i32_10 = arith.constant 4 : i32
    %42 = vector.broadcast %c4_i32_10 : i32 to vector<32x1xi32>
    %43 = arith.cmpi sge, %19, %42 : vector<32x1xi32>
    %cst_11 = arith.constant 0.000000e+00 : f32
    %44 = vector.shape_cast %43 : vector<32x1xi1> to vector<32x1xi1>
    %45 = vector.broadcast %44 : vector<32x1xi1> to vector<32x32xi1>
    %46 = vector.broadcast %cst_11 : f32 to vector<32x32xf32>
    %47 = arith.select %45, %41, %46 : vector<32x32xi1>, vector<32x32xf32>
    %c3_i32 = arith.constant 3 : i32
    %48 = tpu.dynamic_rotate %2 by %c3_i32 dim 0 : vector<32x32xf32>, i32 -> vector<32x32xf32>
    %c3_i32_12 = arith.constant 3 : i32
    %49 = vector.broadcast %c3_i32_12 : i32 to vector<32x1xi32>
    %50 = arith.cmpi sge, %19, %49 : vector<32x1xi32>
    %cst_13 = arith.constant 0.000000e+00 : f32
    %51 = vector.shape_cast %50 : vector<32x1xi1> to vector<32x1xi1>
    %52 = vector.broadcast %51 : vector<32x1xi1> to vector<32x32xi1>
    %53 = vector.broadcast %cst_13 : f32 to vector<32x32xf32>
    %54 = arith.select %52, %48, %53 : vector<32x32xi1>, vector<32x32xf32>
    %c2_i32 = arith.constant 2 : i32
    %55 = tpu.dynamic_rotate %2 by %c2_i32 dim 0 : vector<32x32xf32>, i32 -> vector<32x32xf32>
    %c2_i32_14 = arith.constant 2 : i32
    %56 = vector.broadcast %c2_i32_14 : i32 to vector<32x1xi32>
    %57 = arith.cmpi sge, %19, %56 : vector<32x1xi32>
    %cst_15 = arith.constant 0.000000e+00 : f32
    %58 = vector.shape_cast %57 : vector<32x1xi1> to vector<32x1xi1>
    %59 = vector.broadcast %58 : vector<32x1xi1> to vector<32x32xi1>
    %60 = vector.broadcast %cst_15 : f32 to vector<32x32xf32>
    %61 = arith.select %59, %55, %60 : vector<32x32xi1>, vector<32x32xf32>
    %c1_i32_16 = arith.constant 1 : i32
    %62 = tpu.dynamic_rotate %2 by %c1_i32_16 dim 0 : vector<32x32xf32>, i32 -> vector<32x32xf32>
    %c1_i32_17 = arith.constant 1 : i32
    %63 = vector.broadcast %c1_i32_17 : i32 to vector<32x1xi32>
    %64 = arith.cmpi sge, %19, %63 : vector<32x1xi32>
    %cst_18 = arith.constant 0.000000e+00 : f32
    %65 = vector.shape_cast %64 : vector<32x1xi1> to vector<32x1xi1>
    %66 = vector.broadcast %65 : vector<32x1xi1> to vector<32x32xi1>
    %67 = vector.broadcast %cst_18 : f32 to vector<32x32xf32>
    %68 = arith.select %66, %62, %67 : vector<32x32xi1>, vector<32x32xf32>
    %c31_i32 = arith.constant 31 : i32
    %69 = tpu.dynamic_rotate %2 by %c31_i32 dim 0 : vector<32x32xf32>, i32 -> vector<32x32xf32>
    %c15_i32 = arith.constant 15 : i32
    %70 = vector.broadcast %c15_i32 : i32 to vector<32x1xi32>
    %71 = arith.cmpi slt, %19, %70 : vector<32x1xi32>
    %cst_19 = arith.constant 0.000000e+00 : f32
    %72 = vector.shape_cast %71 : vector<32x1xi1> to vector<32x1xi1>
    %73 = vector.broadcast %72 : vector<32x1xi1> to vector<32x32xi1>
    %74 = vector.broadcast %cst_19 : f32 to vector<32x32xf32>
    %75 = arith.select %73, %69, %74 : vector<32x32xi1>, vector<32x32xf32>
    %c30_i32 = arith.constant 30 : i32
    %76 = tpu.dynamic_rotate %2 by %c30_i32 dim 0 : vector<32x32xf32>, i32 -> vector<32x32xf32>
    %c14_i32 = arith.constant 14 : i32
    %77 = vector.broadcast %c14_i32 : i32 to vector<32x1xi32>
    %78 = arith.cmpi slt, %19, %77 : vector<32x1xi32>
    %cst_20 = arith.constant 0.000000e+00 : f32
    %79 = vector.shape_cast %78 : vector<32x1xi1> to vector<32x1xi1>
    %80 = vector.broadcast %79 : vector<32x1xi1> to vector<32x32xi1>
    %81 = vector.broadcast %cst_20 : f32 to vector<32x32xf32>
    %82 = arith.select %80, %76, %81 : vector<32x32xi1>, vector<32x32xf32>
    %c29_i32 = arith.constant 29 : i32
    %83 = tpu.dynamic_rotate %2 by %c29_i32 dim 0 : vector<32x32xf32>, i32 -> vector<32x32xf32>
    %c13_i32 = arith.constant 13 : i32
    %84 = vector.broadcast %c13_i32 : i32 to vector<32x1xi32>
    %85 = arith.cmpi slt, %19, %84 : vector<32x1xi32>
    %cst_21 = arith.constant 0.000000e+00 : f32
    %86 = vector.shape_cast %85 : vector<32x1xi1> to vector<32x1xi1>
    %87 = vector.broadcast %86 : vector<32x1xi1> to vector<32x32xi1>
    %88 = vector.broadcast %cst_21 : f32 to vector<32x32xf32>
    %89 = arith.select %87, %83, %88 : vector<32x32xi1>, vector<32x32xf32>
    %c28_i32 = arith.constant 28 : i32
    %90 = tpu.dynamic_rotate %2 by %c28_i32 dim 0 : vector<32x32xf32>, i32 -> vector<32x32xf32>
    %c12_i32 = arith.constant 12 : i32
    %91 = vector.broadcast %c12_i32 : i32 to vector<32x1xi32>
    %92 = arith.cmpi slt, %19, %91 : vector<32x1xi32>
    %cst_22 = arith.constant 0.000000e+00 : f32
    %93 = vector.shape_cast %92 : vector<32x1xi1> to vector<32x1xi1>
    %94 = vector.broadcast %93 : vector<32x1xi1> to vector<32x32xi1>
    %95 = vector.broadcast %cst_22 : f32 to vector<32x32xf32>
    %96 = arith.select %94, %90, %95 : vector<32x32xi1>, vector<32x32xf32>
    %c27_i32 = arith.constant 27 : i32
    %97 = tpu.dynamic_rotate %2 by %c27_i32 dim 0 : vector<32x32xf32>, i32 -> vector<32x32xf32>
    %c11_i32 = arith.constant 11 : i32
    %98 = vector.broadcast %c11_i32 : i32 to vector<32x1xi32>
    %99 = arith.cmpi slt, %19, %98 : vector<32x1xi32>
    %cst_23 = arith.constant 0.000000e+00 : f32
    %100 = vector.shape_cast %99 : vector<32x1xi1> to vector<32x1xi1>
    %101 = vector.broadcast %100 : vector<32x1xi1> to vector<32x32xi1>
    %102 = vector.broadcast %cst_23 : f32 to vector<32x32xf32>
    %103 = arith.select %101, %97, %102 : vector<32x32xi1>, vector<32x32xf32>
    %c26_i32 = arith.constant 26 : i32
    %104 = tpu.dynamic_rotate %2 by %c26_i32 dim 0 : vector<32x32xf32>, i32 -> vector<32x32xf32>
    %c10_i32 = arith.constant 10 : i32
    %105 = vector.broadcast %c10_i32 : i32 to vector<32x1xi32>
    %106 = arith.cmpi slt, %19, %105 : vector<32x1xi32>
    %cst_24 = arith.constant 0.000000e+00 : f32
    %107 = vector.shape_cast %106 : vector<32x1xi1> to vector<32x1xi1>
    %108 = vector.broadcast %107 : vector<32x1xi1> to vector<32x32xi1>
    %109 = vector.broadcast %cst_24 : f32 to vector<32x32xf32>
    %110 = arith.select %108, %104, %109 : vector<32x32xi1>, vector<32x32xf32>
    %c25_i32 = arith.constant 25 : i32
    %111 = tpu.dynamic_rotate %2 by %c25_i32 dim 0 : vector<32x32xf32>, i32 -> vector<32x32xf32>
    %c9_i32 = arith.constant 9 : i32
    %112 = vector.broadcast %c9_i32 : i32 to vector<32x1xi32>
    %113 = arith.cmpi slt, %19, %112 : vector<32x1xi32>
    %cst_25 = arith.constant 0.000000e+00 : f32
    %114 = vector.shape_cast %113 : vector<32x1xi1> to vector<32x1xi1>
    %115 = vector.broadcast %114 : vector<32x1xi1> to vector<32x32xi1>
    %116 = vector.broadcast %cst_25 : f32 to vector<32x32xf32>
    %117 = arith.select %115, %111, %116 : vector<32x32xi1>, vector<32x32xf32>
    %118 = tpu.concatenate %26, %33, %40, %47, %54, %61, %68, %2, %75, %82, %89, %96, %103, %110, %117 in 1 : vector<32x32xf32>, vector<32x32xf32>, vector<32x32xf32>, vector<32x32xf32>, vector<32x32xf32>, vector<32x32xf32>, vector<32x32xf32>, vector<32x32xf32>, vector<32x32xf32>, vector<32x32xf32>, vector<32x32xf32>, vector<32x32xf32>, vector<32x32xf32>, vector<32x32xf32>, vector<32x32xf32> -> vector<32x480xf32>
    %119 = arith.truncf %118 : vector<32x480xf32> to vector<32x480xbf16>
    %c0_26 = arith.constant 0 : index
    %c0_27 = arith.constant 0 : index
    %120 = vector.load %arg2[%c0_26, %c0_27] : memref<480x128xbf16, #tpu.memory_space<vmem>>, vector<480x128xbf16>
    %cst_28 = arith.constant dense<0.000000e+00> : vector<32x128xf32>
    %121 = tpu.matmul %119, %120, %cst_28 {dimension_numbers = #tpu.dot_dimension_numbers<[1], [0], [0], [1], [0, 0, 1, 1], [], []>} : vector<32x480xbf16>, vector<480x128xbf16>, vector<32x128xf32> -> vector<32x128xf32>
    %c0_29 = arith.constant 0 : index
    %c0_30 = arith.constant 0 : index
    %122 = vector.load %arg3[%c0_29, %c0_30] : memref<1x128xf32, #tpu.memory_space<vmem>>, vector<1x128xf32>
    %123 = vector.broadcast %122 : vector<1x128xf32> to vector<32x128xf32>
    %124 = arith.addf %121, %123 : vector<32x128xf32>
    %125 = math.tanh %124 : vector<32x128xf32>
    %c2_i32_31 = arith.constant 2 : i32
    %126 = tpu.dynamic_rotate %125 by %c2_i32_31 dim 0 : vector<32x128xf32>, i32 -> vector<32x128xf32>
    %cst_32 = arith.constant 0.000000e+00 : f32
    %127 = vector.shape_cast %57 : vector<32x1xi1> to vector<32x1xi1>
    %128 = vector.broadcast %127 : vector<32x1xi1> to vector<32x128xi1>
    %129 = vector.broadcast %cst_32 : f32 to vector<32x128xf32>
    %130 = arith.select %128, %126, %129 : vector<32x128xi1>, vector<32x128xf32>
    %c1_i32_33 = arith.constant 1 : i32
    %131 = tpu.dynamic_rotate %125 by %c1_i32_33 dim 0 : vector<32x128xf32>, i32 -> vector<32x128xf32>
    %cst_34 = arith.constant 0.000000e+00 : f32
    %132 = vector.shape_cast %64 : vector<32x1xi1> to vector<32x1xi1>
    %133 = vector.broadcast %132 : vector<32x1xi1> to vector<32x128xi1>
    %134 = vector.broadcast %cst_34 : f32 to vector<32x128xf32>
    %135 = arith.select %133, %131, %134 : vector<32x128xi1>, vector<32x128xf32>
    %c31_i32_35 = arith.constant 31 : i32
    %136 = tpu.dynamic_rotate %125 by %c31_i32_35 dim 0 : vector<32x128xf32>, i32 -> vector<32x128xf32>
    %cst_36 = arith.constant 0.000000e+00 : f32
    %137 = vector.shape_cast %71 : vector<32x1xi1> to vector<32x1xi1>
    %138 = vector.broadcast %137 : vector<32x1xi1> to vector<32x128xi1>
    %139 = vector.broadcast %cst_36 : f32 to vector<32x128xf32>
    %140 = arith.select %138, %136, %139 : vector<32x128xi1>, vector<32x128xf32>
    %c30_i32_37 = arith.constant 30 : i32
    %141 = tpu.dynamic_rotate %125 by %c30_i32_37 dim 0 : vector<32x128xf32>, i32 -> vector<32x128xf32>
    %cst_38 = arith.constant 0.000000e+00 : f32
    %142 = vector.shape_cast %78 : vector<32x1xi1> to vector<32x1xi1>
    %143 = vector.broadcast %142 : vector<32x1xi1> to vector<32x128xi1>
    %144 = vector.broadcast %cst_38 : f32 to vector<32x128xf32>
    %145 = arith.select %143, %141, %144 : vector<32x128xi1>, vector<32x128xf32>
    %146 = tpu.concatenate %130, %135, %125, %140, %145 in 1 : vector<32x128xf32>, vector<32x128xf32>, vector<32x128xf32>, vector<32x128xf32>, vector<32x128xf32> -> vector<32x640xf32>
    %147 = arith.truncf %146 : vector<32x640xf32> to vector<32x640xbf16>
    %c0_39 = arith.constant 0 : index
    %c0_40 = arith.constant 0 : index
    %148 = vector.load %arg4[%c0_39, %c0_40] : memref<640x16xbf16, #tpu.memory_space<vmem>>, vector<640x16xbf16>
    %cst_41 = arith.constant dense<0.000000e+00> : vector<32x16xf32>
    %149 = tpu.matmul %147, %148, %cst_41 {dimension_numbers = #tpu.dot_dimension_numbers<[1], [0], [0], [1], [0, 0, 1, 1], [], []>} : vector<32x640xbf16>, vector<640x16xbf16>, vector<32x16xf32> -> vector<32x16xf32>
    %c0_42 = arith.constant 0 : index
    %c0_43 = arith.constant 0 : index
    %150 = vector.load %arg5[%c0_42, %c0_43] : memref<1x16xf32, #tpu.memory_space<vmem>>, vector<1x16xf32>
    %151 = vector.broadcast %150 : vector<1x16xf32> to vector<32x16xf32>
    %152 = arith.addf %149, %151 : vector<32x16xf32>
    %153 = math.tanh %152 : vector<32x16xf32>
    %c0_44 = arith.constant 0 : index
    %c0_45 = arith.constant 0 : index
    %154 = vector.load %arg6[%c0_44, %c0_45] : memref<1x16xf32, #tpu.memory_space<vmem>>, vector<1x16xf32>
    "tpu.trace_start"() <{level = 10 : i32, message = "oc,mc->om"}> : () -> ()
    %cst_46 = arith.constant dense<0.000000e+00> : vector<1x32xf32>
    %155 = tpu.matmul %154, %153, %cst_46 {dimension_numbers = #tpu.dot_dimension_numbers<[1], [1], [0], [0], [0, 0, 1, 0], [], []>} : vector<1x16xf32>, vector<32x16xf32>, vector<1x32xf32> -> vector<1x32xf32>
    "tpu.trace_stop"() : () -> ()
    %c0_47 = arith.constant 0 : index
    %c0_48 = arith.constant 0 : index
    %156 = vector.load %arg7[%c0_47, %c0_48] : memref<1x1xf32, #tpu.memory_space<vmem>>, vector<1x1xf32>
    %157 = vector.broadcast %156 : vector<1x1xf32> to vector<1x32xf32>
    %158 = arith.addf %155, %157 : vector<1x32xf32>
    %c0_49 = arith.constant 0 : index
    %c0_50 = arith.constant 0 : index
    %c0_51 = arith.constant 0 : index
    %159 = vector.load %arg8[%c0_49, %c0_50, %c0_51] : memref<1x1x32xf32, #tpu.memory_space<vmem>>, vector<1x1x32xf32>
    %160 = vector.shape_cast %159 : vector<1x1x32xf32> to vector<1x32xf32>
    %161 = vector.shape_cast %158 : vector<1x32xf32> to vector<1x1x32xf32>
    tpu.vector_store %arg8[%c0_49, %c0_50, %c0_51], %161 {strides = array<i32>} : memref<1x1x32xf32, #tpu.memory_space<vmem>>, vector<1x1x32xf32>,
    return
  }
  func.func @transform_0(%arg0: i32) -> (i32, i32, i32) {
    %c0_i32 = arith.constant 0 : i32
    %c0_i32_0 = arith.constant 0 : i32
    %c0_i32_1 = arith.constant 0 : i32
    return %arg0, %c0_i32, %c0_i32_0 : i32, i32, i32
  }
  func.func @transform_1(%arg0: i32) -> (i32, i32) {
    %c0_i32 = arith.constant 0 : i32
    %c0_i32_0 = arith.constant 0 : i32
    %c0_i32_1 = arith.constant 0 : i32
    return %c0_i32, %c0_i32_0 : i32, i32
  }
  func.func @transform_2(%arg0: i32) -> (i32, i32) {
    %c0_i32 = arith.constant 0 : i32
    %c0_i32_0 = arith.constant 0 : i32
    %c0_i32_1 = arith.constant 0 : i32
    return %c0_i32, %c0_i32_0 : i32, i32
  }
  func.func @transform_3(%arg0: i32) -> (i32, i32) {
    %c0_i32 = arith.constant 0 : i32
    %c0_i32_0 = arith.constant 0 : i32
    %c0_i32_1 = arith.constant 0 : i32
    return %c0_i32, %c0_i32_0 : i32, i32
  }
  func.func @transform_4(%arg0: i32) -> (i32, i32) {
    %c0_i32 = arith.constant 0 : i32
    %c0_i32_0 = arith.constant 0 : i32
    %c0_i32_1 = arith.constant 0 : i32
    return %c0_i32, %c0_i32_0 : i32, i32
  }
  func.func @transform_5(%arg0: i32) -> (i32, i32) {
    %c0_i32 = arith.constant 0 : i32
    %c0_i32_0 = arith.constant 0 : i32
    %c0_i32_1 = arith.constant 0 : i32
    return %c0_i32, %c0_i32_0 : i32, i32
  }
  func.func @transform_6(%arg0: i32) -> (i32, i32) {
    %c0_i32 = arith.constant 0 : i32
    %c0_i32_0 = arith.constant 0 : i32
    %c0_i32_1 = arith.constant 0 : i32
    return %c0_i32, %c0_i32_0 : i32, i32
  }
  func.func @transform_7(%arg0: i32) -> (i32, i32, i32) {
    %c0_i32 = arith.constant 0 : i32
    %c0_i32_0 = arith.constant 0 : i32
    %c0_i32_1 = arith.constant 0 : i32
    return %arg0, %c0_i32, %c0_i32_0 : i32, i32, i32
  }
}

</mosaic_0001>

<llo_original>
// kernel: tpu_custom_call.1
$region0: #{tpu_custom_call.1}
  #allocation0 [shape = 'u32[]', space=smem, size = 0x4, offset = 0x4, fixed_abs, tag = 'smem constant byte address 0x4 - core index']
  #allocation1 [shape = 'u32[72,128]{1,0:T(1,128)}', space=vmem, size = 0x9000, scoped, tag = 'internal scratch']
  #allocation2 [shape = 'f32[1,1]{1,0:T(1,128)S(1)}', space=vmem, size = 0x200, scoped, tag = 'scoped memory for tpu_custom_call.1']
  %s0 = inlined_call_operand.vmem [shape: bf16[1,32,32], index: 0, kind: input, shape index: {}]
  %s1 = inlined_call_operand.vmem [shape: bf16[480,128], index: 1, kind: input, shape index: {}]
  %s2 = inlined_call_operand.vmem [shape: f32[1,128], index: 2, kind: input, shape index: {}]
  %s3 = inlined_call_operand.vmem [shape: bf16[640,16], index: 3, kind: input, shape index: {}]
  %s4 = inlined_call_operand.vmem [shape: f32[1,16], index: 4, kind: input, shape index: {}]
  %s5 = inlined_call_operand.vmem [shape: f32[1,16], index: 5, kind: input, shape index: {}]
  %s6 = inlined_call_operand.<no memory space> [shape: f32[1,1], index: 6, kind: input, shape index: {}]
  %s7 = inlined_call_operand.hbm [shape: f32[1,1,32], index: 7, kind: output, shape index: {}]
  %s8 = sld [smem:[#allocation0]]
  $region38: #{tpu_custom_call.1} parent=0
    _
  %s10 = ssub.s32 1, %s8
  %s11 = scalar_select 0, %s10, %s8
  %v12 = vstv %s6
  %13 = vst [vmem:[#allocation2] sm:$0x1] %v12
  $region1: #{tpu_custom_call.1} parent=0
    #allocation3 [shape = 'u8[512]{0}', space=vmem, size = 0x400, scoped, tag = 'output window, operand 0, single buffered']
    #allocation4 [shape = 's32[1]{0}', space=sflag, size = 0x4, scoped, tag = 'scoped memory for tpu_custom_call.1']
    %14 = vsyncpa [#allocation4], 0
    // Predicated region
    $region2: #{tpu_custom_call.1} parent=1 // pred_check
      _
    $region3: #{tpu_custom_call.1} parent=1 // pred_check_branch
      %16 = sbr.rel (0) target = $region5
    $region4: #{tpu_custom_call.1} parent=1 // pred_region
      _
    $region5: #{tpu_custom_call.1} parent=1 // pred_fallthru
      _
    // Predicated region
    $region6: #{tpu_custom_call.1} parent=1 // pred_check
      _
    $region7: #{tpu_custom_call.1} parent=1 // pred_check_branch
      %18 = sbr.rel (0) target = $region9
    $region8: #{tpu_custom_call.1} parent=1 // pred_region
      _
    $region9: #{tpu_custom_call.1} parent=1 // pred_fallthru
      _
    // Predicated region
    $region10: #{tpu_custom_call.1} parent=1 // pred_check
      _
    $region11: #{tpu_custom_call.1} parent=1 // pred_check_branch
      %20 = sbr.rel (0) target = $region13
    $region12: #{tpu_custom_call.1} parent=1 // pred_region
      _
    $region13: #{tpu_custom_call.1} parent=1 // pred_fallthru
      _
    // Predicated region
    $region14: #{tpu_custom_call.1} parent=1 // pred_check
      _
    $region15: #{tpu_custom_call.1} parent=1 // pred_check_branch
      %22 = sbr.rel (0) target = $region17
    $region16: #{tpu_custom_call.1} parent=1 // pred_region
      _
    $region17: #{tpu_custom_call.1} parent=1 // pred_fallthru
      _
    // Predicated region
    $region18: #{tpu_custom_call.1} parent=1 // pred_check
      _
    $region19: #{tpu_custom_call.1} parent=1 // pred_check_branch
      %24 = sbr.rel (0) target = $region21
    $region20: #{tpu_custom_call.1} parent=1 // pred_region
      _
    $region21: #{tpu_custom_call.1} parent=1 // pred_fallthru
      _
    // Predicated region
    $region22: #{tpu_custom_call.1} parent=1 // pred_check
      _
    $region23: #{tpu_custom_call.1} parent=1 // pred_check_branch
      %26 = sbr.rel (0) target = $region25
    $region24: #{tpu_custom_call.1} parent=1 // pred_region
      _
    $region25: #{tpu_custom_call.1} parent=1 // pred_fallthru
      _
    // Predicated region
    $region26: #{tpu_custom_call.1} parent=1 // pred_check
      _
    $region27: #{tpu_custom_call.1} parent=1 // pred_check_branch
      %28 = sbr.rel (0) target = $region29
    $region28: #{tpu_custom_call.1} parent=1 // pred_region
      _
    $region29: #{tpu_custom_call.1} parent=1 // pred_fallthru
      _
    %v30 = vld [vmem:[%s0] sm:$0xf]
    %v31 = vld [vmem:[%s0 + $0x4] sm:$0xf]
    %v32 = vld [vmem:[%s0 + $0x8] sm:$0xf]
    %v33 = vld [vmem:[%s0 + $0xc] sm:$0xf]
    %v34 = vunpack.c.l.bf16 %v30
    %v35 = vunpack.c.l.bf16 %v31
    %v36 = vunpack.c.l.bf16 %v32
    %v37 = vunpack.c.l.bf16 %v33
    %v38 = vlaneseq
    %v39 = vshrl.u32 %v38, 7
    %v40 = vadd.s32 %v39, 8
    %v41 = vadd.s32 %v39, 16
    %v42 = vadd.s32 %v39, 24
    %vm43 = vcmp.lt.s32.totalorder %v39, 0
    %v44 = vsub.s32 0, %v39
    %v45 = vsel %vm43, %v44, %v39
    %v46 = vshrl.u32 %v45, 4
    %v47 = vand.u32 %v45, 15
    %v48 = vsub.s32 0, %v47
    %v49 = vsel %vm43, %v48, %v47
    %vm50 = vcmp.lt.s32.totalorder %v40, 0
    %v51 = vsub.s32 0, %v40
    %v52 = vsel %vm50, %v51, %v40
    %v53 = vshrl.u32 %v52, 4
    %v54 = vand.u32 %v52, 15
    %v55 = vsub.s32 0, %v54
    %v56 = vsel %vm50, %v55, %v54
    %vm57 = vcmp.lt.s32.totalorder %v41, 0
    %v58 = vsub.s32 0, %v41
    %v59 = vsel %vm57, %v58, %v41
    %v60 = vshrl.u32 %v59, 4
    %v61 = vand.u32 %v59, 15
    %v62 = vsub.s32 0, %v61
    %v63 = vsel %vm57, %v62, %v61
    %vm64 = vcmp.lt.s32.totalorder %v42, 0
    %v65 = vsub.s32 0, %v42
    %v66 = vsel %vm64, %v65, %v42
    %v67 = vshrl.u32 %v66, 4
    %v68 = vand.u32 %v66, 15
    %v69 = vsub.s32 0, %v68
    %v70 = vsel %vm64, %v69, %v68
    %vm71 = vcmp.ne.s32.totalorder %v49, 0
    %vm72 = vcmp.ne.s32.totalorder %v56, 0
    %vm73 = vcmp.ne.s32.totalorder %v63, 0
    %vm74 = vcmp.ne.s32.totalorder %v70, 0
    %vm75 = vcmp.lt.s32.totalorder %v49, 0
    %vm76 = vcmp.lt.s32.totalorder %v56, 0
    %vm77 = vcmp.lt.s32.totalorder %v63, 0
    %vm78 = vcmp.lt.s32.totalorder %v70, 0
    %vm79 = vmand %vm75, %vm71
    %vm80 = vmand %vm76, %vm72
    %vm81 = vmand %vm77, %vm73
    %vm82 = vmand %vm78, %vm74
    %v83 = vadd.s32 %v49, 16
    %v84 = vadd.s32 %v56, 16
    %v85 = vadd.s32 %v63, 16
    %v86 = vadd.s32 %v70, 16
    %v87 = vsel %vm79, %v83, %v49
    %v88 = vsel %vm80, %v84, %v56
    %v89 = vsel %vm81, %v85, %v63
    %v90 = vsel %vm82, %v86, %v70
    %v91 = vrot.slane %v34, 1
    %v92 = vrot.slane %v35, 1
    %v93 = vrot.slane %v36, 1
    %v94 = vrot.slane %v37, 1
    %vm95 = vcmp.lt.s32.totalorder %v39, 7
    %v96 = vsel %vm95, %v93, %v94
    %v97 = vsel %vm95, %v92, %v93
    %v98 = vsel %vm95, %v91, %v92
    %v99 = vsel %vm95, %v94, %v91
    %vm100 = vcmp.ge.s32.totalorder %v87, 7
    %vm101 = vcmp.ge.s32.totalorder %v88, 7
    %vm102 = vcmp.ge.s32.totalorder %v89, 7
    %vm103 = vcmp.ge.s32.totalorder %v90, 7
    %v104 = vsel %vm100, 1, 0
    %v105 = vsel %vm101, 1, 0
    %v106 = vsel %vm102, 1, 0
    %v107 = vsel %vm103, 1, 0
    %vm108 = vcmp.eq.s32.totalorder %v104, 1
    %vm109 = vcmp.eq.s32.totalorder %v105, 1
    %vm110 = vcmp.eq.s32.totalorder %v106, 1
    %vm111 = vcmp.eq.s32.totalorder %v107, 1
    %v112 = vsel %vm108, %v99, 0.0
    %v113 = vsel %vm109, %v98, 0.0
    %v114 = vsel %vm110, %v97, 0.0
    %v115 = vsel %vm111, %v96, 0.0
    %v116 = vrot.slane %v34, 2
    %v117 = vrot.slane %v35, 2
    %v118 = vrot.slane %v36, 2
    %v119 = vrot.slane %v37, 2
    %vm120 = vcmp.lt.s32.totalorder %v39, 6
    %v121 = vsel %vm120, %v118, %v119
    %v122 = vsel %vm120, %v117, %v118
    %v123 = vsel %vm120, %v116, %v117
    %v124 = vsel %vm120, %v119, %v116
    %vm125 = vcmp.ge.s32.totalorder %v87, 6
    %vm126 = vcmp.ge.s32.totalorder %v88, 6
    %vm127 = vcmp.ge.s32.totalorder %v89, 6
    %vm128 = vcmp.ge.s32.totalorder %v90, 6
    %v129 = vsel %vm125, 1, 0
    %v130 = vsel %vm126, 1, 0
    %v131 = vsel %vm127, 1, 0
    %v132 = vsel %vm128, 1, 0
    %vm133 = vcmp.eq.s32.totalorder %v129, 1
    %vm134 = vcmp.eq.s32.totalorder %v130, 1
    %vm135 = vcmp.eq.s32.totalorder %v131, 1
    %vm136 = vcmp.eq.s32.totalorder %v132, 1
    %v137 = vsel %vm133, %v124, 0.0
    %v138 = vsel %vm134, %v123, 0.0
    %v139 = vsel %vm135, %v122, 0.0
    %v140 = vsel %vm136, %v121, 0.0
    %v141 = vrot.slane %v34, 3
    %v142 = vrot.slane %v35, 3
    %v143 = vrot.slane %v36, 3
    %v144 = vrot.slane %v37, 3
    %vm145 = vcmp.lt.s32.totalorder %v39, 5
    %v146 = vsel %vm145, %v143, %v144
    %v147 = vsel %vm145, %v142, %v143
    %v148 = vsel %vm145, %v141, %v142
    %v149 = vsel %vm145, %v144, %v141
    %vm150 = vcmp.ge.s32.totalorder %v87, 5
    %vm151 = vcmp.ge.s32.totalorder %v88, 5
    %vm152 = vcmp.ge.s32.totalorder %v89, 5
    %vm153 = vcmp.ge.s32.totalorder %v90, 5
    %v154 = vsel %vm150, 1, 0
    %v155 = vsel %vm151, 1, 0
    %v156 = vsel %vm152, 1, 0
    %v157 = vsel %vm153, 1, 0
    %vm158 = vcmp.eq.s32.totalorder %v154, 1
    %vm159 = vcmp.eq.s32.totalorder %v155, 1
    %vm160 = vcmp.eq.s32.totalorder %v156, 1
    %vm161 = vcmp.eq.s32.totalorder %v157, 1
    %v162 = vsel %vm158, %v149, 0.0
    %v163 = vsel %vm159, %v148, 0.0
    %v164 = vsel %vm160, %v147, 0.0
    %v165 = vsel %vm161, %v146, 0.0
    %v166 = vrot.slane %v34, 4
    %v167 = vrot.slane %v35, 4
    %v168 = vrot.slane %v36, 4
    %v169 = vrot.slane %v37, 4
    %vm170 = vcmp.lt.s32.totalorder %v39, 4
    %v171 = vsel %vm170, %v168, %v169
    %v172 = vsel %vm170, %v167, %v168
    %v173 = vsel %vm170, %v166, %v167
    %v174 = vsel %vm170, %v169, %v166
    %vm175 = vcmp.ge.s32.totalorder %v87, 4
    %vm176 = vcmp.ge.s32.totalorder %v88, 4
    %vm177 = vcmp.ge.s32.totalorder %v89, 4
    %vm178 = vcmp.ge.s32.totalorder %v90, 4
    %v179 = vsel %vm175, 1, 0
    %v180 = vsel %vm176, 1, 0
    %v181 = vsel %vm177, 1, 0
    %v182 = vsel %vm178, 1, 0
    %vm183 = vcmp.eq.s32.totalorder %v179, 1
    %vm184 = vcmp.eq.s32.totalorder %v180, 1
    %vm185 = vcmp.eq.s32.totalorder %v181, 1
    %vm186 = vcmp.eq.s32.totalorder %v182, 1
    %v187 = vsel %vm183, %v174, 0.0
    %v188 = vsel %vm184, %v173, 0.0
    %v189 = vsel %vm185, %v172, 0.0
    %v190 = vsel %vm186, %v171, 0.0
    %v191 = vrot.slane %v34, 5
    %v192 = vrot.slane %v35, 5
    %v193 = vrot.slane %v36, 5
    %v194 = vrot.slane %v37, 5
    %vm195 = vcmp.lt.s32.totalorder %v39, 3
    %v196 = vsel %vm195, %v193, %v194
    %v197 = vsel %vm195, %v192, %v193
    %v198 = vsel %vm195, %v191, %v192
    %v199 = vsel %vm195, %v194, %v191
    %vm200 = vcmp.ge.s32.totalorder %v87, 3
    %vm201 = vcmp.ge.s32.totalorder %v88, 3
    %vm202 = vcmp.ge.s32.totalorder %v89, 3
    %vm203 = vcmp.ge.s32.totalorder %v90, 3
    %v204 = vsel %vm200, 1, 0
    %v205 = vsel %vm201, 1, 0
    %v206 = vsel %vm202, 1, 0
    %v207 = vsel %vm203, 1, 0
    %vm208 = vcmp.eq.s32.totalorder %v204, 1
    %vm209 = vcmp.eq.s32.totalorder %v205, 1
    %vm210 = vcmp.eq.s32.totalorder %v206, 1
    %vm211 = vcmp.eq.s32.totalorder %v207, 1
    %v212 = vsel %vm208, %v199, 0.0
    %v213 = vsel %vm209, %v198, 0.0
    %v214 = vsel %vm210, %v197, 0.0
    %v215 = vsel %vm211, %v196, 0.0
    %v216 = vrot.slane %v34, 6
    %v217 = vrot.slane %v35, 6
    %v218 = vrot.slane %v36, 6
    %v219 = vrot.slane %v37, 6
    %vm220 = vcmp.lt.s32.totalorder %v39, 2
    %v221 = vsel %vm220, %v218, %v219
    %v222 = vsel %vm220, %v217, %v218
    %v223 = vsel %vm220, %v216, %v217
    %v224 = vsel %vm220, %v219, %v216
    %vm225 = vcmp.ge.s32.totalorder %v87, 2
    %vm226 = vcmp.ge.s32.totalorder %v88, 2
    %vm227 = vcmp.ge.s32.totalorder %v89, 2
    %vm228 = vcmp.ge.s32.totalorder %v90, 2
    %v229 = vsel %vm225, 1, 0
    %v230 = vsel %vm226, 1, 0
    %v231 = vsel %vm227, 1, 0
    %v232 = vsel %vm228, 1, 0
    %vm233 = vcmp.eq.s32.totalorder %v229, 1
    %vm234 = vcmp.eq.s32.totalorder %v230, 1
    %vm235 = vcmp.eq.s32.totalorder %v231, 1
    %vm236 = vcmp.eq.s32.totalorder %v232, 1
    %v237 = vsel %vm233, %v224, 0.0
    %v238 = vsel %vm234, %v223, 0.0
    %v239 = vsel %vm235, %v222, 0.0
    %v240 = vsel %vm236, %v221, 0.0
    %v241 = vrot.slane %v34, 7
    %v242 = vrot.slane %v35, 7
    %v243 = vrot.slane %v36, 7
    %v244 = vrot.slane %v37, 7
    %vm245 = vcmp.lt.s32.totalorder %v39, 1
    %v246 = vsel %vm245, %v243, %v244
    %v247 = vsel %vm245, %v242, %v243
    %v248 = vsel %vm245, %v241, %v242
    %v249 = vsel %vm245, %v244, %v241
    %vm250 = vcmp.ge.s32.totalorder %v87, 1
    %vm251 = vcmp.ge.s32.totalorder %v88, 1
    %vm252 = vcmp.ge.s32.totalorder %v89, 1
    %vm253 = vcmp.ge.s32.totalorder %v90, 1
    %v254 = vsel %vm250, 1, 0
    %v255 = vsel %vm251, 1, 0
    %v256 = vsel %vm252, 1, 0
    %v257 = vsel %vm253, 1, 0
    %vm258 = vcmp.eq.s32.totalorder %v254, 1
    %vm259 = vcmp.eq.s32.totalorder %v255, 1
    %vm260 = vcmp.eq.s32.totalorder %v256, 1
    %vm261 = vcmp.eq.s32.totalorder %v257, 1
    %v262 = vsel %vm258, %v249, 0.0
    %v263 = vsel %vm259, %v248, 0.0
    %v264 = vsel %vm260, %v247, 0.0
    %v265 = vsel %vm261, %v246, 0.0
    %vm266 = vcmp.lt.s32.totalorder %v87, 15
    %vm267 = vcmp.lt.s32.totalorder %v88, 15
    %vm268 = vcmp.lt.s32.totalorder %v89, 15
    %vm269 = vcmp.lt.s32.totalorder %v90, 15
    %v270 = vsel %vm266, 1, 0
    %v271 = vsel %vm267, 1, 0
    %v272 = vsel %vm268, 1, 0
    %v273 = vsel %vm269, 1, 0
    %vm274 = vcmp.eq.s32.totalorder %v270, 1
    %vm275 = vcmp.eq.s32.totalorder %v271, 1
    %vm276 = vcmp.eq.s32.totalorder %v272, 1
    %vm277 = vcmp.eq.s32.totalorder %v273, 1
    %v278 = vsel %vm274, %v98, 0.0
    %v279 = vsel %vm275, %v97, 0.0
    %v280 = vsel %vm276, %v96, 0.0
    %v281 = vsel %vm277, %v99, 0.0
    %vm282 = vcmp.lt.s32.totalorder %v87, 14
    %vm283 = vcmp.lt.s32.totalorder %v88, 14
    %vm284 = vcmp.lt.s32.totalorder %v89, 14
    %vm285 = vcmp.lt.s32.totalorder %v90, 14
    %v286 = vsel %vm282, 1, 0
    %v287 = vsel %vm283, 1, 0
    %v288 = vsel %vm284, 1, 0
    %v289 = vsel %vm285, 1, 0
    %vm290 = vcmp.eq.s32.totalorder %v286, 1
    %vm291 = vcmp.eq.s32.totalorder %v287, 1
    %vm292 = vcmp.eq.s32.totalorder %v288, 1
    %vm293 = vcmp.eq.s32.totalorder %v289, 1
    %v294 = vsel %vm290, %v123, 0.0
    %v295 = vsel %vm291, %v122, 0.0
    %v296 = vsel %vm292, %v121, 0.0
    %v297 = vsel %vm293, %v124, 0.0
    %vm298 = vcmp.lt.s32.totalorder %v87, 13
    %vm299 = vcmp.lt.s32.totalorder %v88, 13
    %vm300 = vcmp.lt.s32.totalorder %v89, 13
    %vm301 = vcmp.lt.s32.totalorder %v90, 13
    %v302 = vsel %vm298, 1, 0
    %v303 = vsel %vm299, 1, 0
    %v304 = vsel %vm300, 1, 0
    %v305 = vsel %vm301, 1, 0
    %vm306 = vcmp.eq.s32.totalorder %v302, 1
    %vm307 = vcmp.eq.s32.totalorder %v303, 1
    %vm308 = vcmp.eq.s32.totalorder %v304, 1
    %vm309 = vcmp.eq.s32.totalorder %v305, 1
    %v310 = vsel %vm306, %v148, 0.0
    %v311 = vsel %vm307, %v147, 0.0
    %v312 = vsel %vm308, %v146, 0.0
    %v313 = vsel %vm309, %v149, 0.0
    %vm314 = vcmp.lt.s32.totalorder %v87, 12
    %vm315 = vcmp.lt.s32.totalorder %v88, 12
    %vm316 = vcmp.lt.s32.totalorder %v89, 12
    %vm317 = vcmp.lt.s32.totalorder %v90, 12
    %v318 = vsel %vm314, 1, 0
    %v319 = vsel %vm315, 1, 0
    %v320 = vsel %vm316, 1, 0
    %v321 = vsel %vm317, 1, 0
    %vm322 = vcmp.eq.s32.totalorder %v318, 1
    %vm323 = vcmp.eq.s32.totalorder %v319, 1
    %vm324 = vcmp.eq.s32.totalorder %v320, 1
    %vm325 = vcmp.eq.s32.totalorder %v321, 1
    %v326 = vsel %vm322, %v173, 0.0
    %v327 = vsel %vm323, %v172, 0.0
    %v328 = vsel %vm324, %v171, 0.0
    %v329 = vsel %vm325, %v174, 0.0
    %vm330 = vcmp.lt.s32.totalorder %v87, 11
    %vm331 = vcmp.lt.s32.totalorder %v88, 11
    %vm332 = vcmp.lt.s32.totalorder %v89, 11
    %vm333 = vcmp.lt.s32.totalorder %v90, 11
    %v334 = vsel %vm330, 1, 0
    %v335 = vsel %vm331, 1, 0
    %v336 = vsel %vm332, 1, 0
    %v337 = vsel %vm333, 1, 0
    %vm338 = vcmp.eq.s32.totalorder %v334, 1
    %vm339 = vcmp.eq.s32.totalorder %v335, 1
    %vm340 = vcmp.eq.s32.totalorder %v336, 1
    %vm341 = vcmp.eq.s32.totalorder %v337, 1
    %v342 = vsel %vm338, %v198, 0.0
    %v343 = vsel %vm339, %v197, 0.0
    %v344 = vsel %vm340, %v196, 0.0
    %v345 = vsel %vm341, %v199, 0.0
    %vm346 = vcmp.lt.s32.totalorder %v87, 10
    %vm347 = vcmp.lt.s32.totalorder %v88, 10
    %vm348 = vcmp.lt.s32.totalorder %v89, 10
    %vm349 = vcmp.lt.s32.totalorder %v90, 10
    %v350 = vsel %vm346, 1, 0
    %v351 = vsel %vm347, 1, 0
    %v352 = vsel %vm348, 1, 0
    %v353 = vsel %vm349, 1, 0
    %vm354 = vcmp.eq.s32.totalorder %v350, 1
    %vm355 = vcmp.eq.s32.totalorder %v351, 1
    %vm356 = vcmp.eq.s32.totalorder %v352, 1
    %vm357 = vcmp.eq.s32.totalorder %v353, 1
    %v358 = vsel %vm354, %v223, 0.0
    %v359 = vsel %vm355, %v222, 0.0
    %v360 = vsel %vm356, %v221, 0.0
    %v361 = vsel %vm357, %v224, 0.0
    %vm362 = vcmp.lt.s32.totalorder %v87, 9
    %vm363 = vcmp.lt.s32.totalorder %v88, 9
    %vm364 = vcmp.lt.s32.totalorder %v89, 9
    %vm365 = vcmp.lt.s32.totalorder %v90, 9
    %v366 = vsel %vm362, 1, 0
    %v367 = vsel %vm363, 1, 0
    %v368 = vsel %vm364, 1, 0
    %v369 = vsel %vm365, 1, 0
    %vm370 = vcmp.eq.s32.totalorder %v366, 1
    %vm371 = vcmp.eq.s32.totalorder %v367, 1
    %vm372 = vcmp.eq.s32.totalorder %v368, 1
    %vm373 = vcmp.eq.s32.totalorder %v369, 1
    %v374 = vsel %vm370, %v248, 0.0
    %v375 = vsel %vm371, %v247, 0.0
    %v376 = vsel %vm372, %v246, 0.0
    %v377 = vsel %vm373, %v249, 0.0
    %382 = vrot.lane.b32.xlu0 %v137, 32
    %v383 = vpop.permute.xlu0 %382
    %384 = vrot.lane.b32.xlu0 %v138, 32
    %v385 = vpop.permute.xlu0 %384
    %386 = vrot.lane.b32.xlu0 %v139, 32
    %v387 = vpop.permute.xlu0 %386
    %388 = vrot.lane.b32.xlu0 %v140, 32
    %v389 = vpop.permute.xlu0 %388
    %398 = vrot.lane.b32.xlu0 %v162, 64
    %v399 = vpop.permute.xlu0 %398
    %400 = vrot.lane.b32.xlu0 %v163, 64
    %v401 = vpop.permute.xlu0 %400
    %402 = vrot.lane.b32.xlu0 %v164, 64
    %v403 = vpop.permute.xlu0 %402
    %404 = vrot.lane.b32.xlu0 %v165, 64
    %v405 = vpop.permute.xlu0 %404
    %414 = vrot.lane.b32.xlu0 %v187, 96
    %v415 = vpop.permute.xlu0 %414
    %416 = vrot.lane.b32.xlu0 %v188, 96
    %v417 = vpop.permute.xlu0 %416
    %418 = vrot.lane.b32.xlu0 %v189, 96
    %v419 = vpop.permute.xlu0 %418
    %420 = vrot.lane.b32.xlu0 %v190, 96
    %v421 = vpop.permute.xlu0 %420
    %430 = vrot.lane.b32.xlu0 %v237, 32
    %v431 = vpop.permute.xlu0 %430
    %432 = vrot.lane.b32.xlu0 %v238, 32
    %v433 = vpop.permute.xlu0 %432
    %434 = vrot.lane.b32.xlu0 %v239, 32
    %v435 = vpop.permute.xlu0 %434
    %436 = vrot.lane.b32.xlu0 %v240, 32
    %v437 = vpop.permute.xlu0 %436
    %446 = vrot.lane.b32.xlu0 %v262, 64
    %v447 = vpop.permute.xlu0 %446
    %448 = vrot.lane.b32.xlu0 %v263, 64
    %v449 = vpop.permute.xlu0 %448
    %450 = vrot.lane.b32.xlu0 %v264, 64
    %v451 = vpop.permute.xlu0 %450
    %452 = vrot.lane.b32.xlu0 %v265, 64
    %v453 = vpop.permute.xlu0 %452
    %462 = vrot.lane.b32.xlu0 %v34, 96
    %v463 = vpop.permute.xlu0 %462
    %464 = vrot.lane.b32.xlu0 %v35, 96
    %v465 = vpop.permute.xlu0 %464
    %466 = vrot.lane.b32.xlu0 %v36, 96
    %v467 = vpop.permute.xlu0 %466
    %468 = vrot.lane.b32.xlu0 %v37, 96
    %v469 = vpop.permute.xlu0 %468
    %478 = vrot.lane.b32.xlu0 %v294, 32
    %v479 = vpop.permute.xlu0 %478
    %480 = vrot.lane.b32.xlu0 %v295, 32
    %v481 = vpop.permute.xlu0 %480
    %482 = vrot.lane.b32.xlu0 %v296, 32
    %v483 = vpop.permute.xlu0 %482
    %484 = vrot.lane.b32.xlu0 %v297, 32
    %v485 = vpop.permute.xlu0 %484
    %494 = vrot.lane.b32.xlu0 %v310, 64
    %v495 = vpop.permute.xlu0 %494
    %496 = vrot.lane.b32.xlu0 %v311, 64
    %v497 = vpop.permute.xlu0 %496
    %498 = vrot.lane.b32.xlu0 %v312, 64
    %v499 = vpop.permute.xlu0 %498
    %500 = vrot.lane.b32.xlu0 %v313, 64
    %v501 = vpop.permute.xlu0 %500
    %510 = vrot.lane.b32.xlu0 %v326, 96
    %v511 = vpop.permute.xlu0 %510
    %512 = vrot.lane.b32.xlu0 %v327, 96
    %v513 = vpop.permute.xlu0 %512
    %514 = vrot.lane.b32.xlu0 %v328, 96
    %v515 = vpop.permute.xlu0 %514
    %516 = vrot.lane.b32.xlu0 %v329, 96
    %v517 = vpop.permute.xlu0 %516
    %526 = vrot.lane.b32.xlu0 %v358, 32
    %v527 = vpop.permute.xlu0 %526
    %528 = vrot.lane.b32.xlu0 %v359, 32
    %v529 = vpop.permute.xlu0 %528
    %530 = vrot.lane.b32.xlu0 %v360, 32
    %v531 = vpop.permute.xlu0 %530
    %532 = vrot.lane.b32.xlu0 %v361, 32
    %v533 = vpop.permute.xlu0 %532
    %542 = vrot.lane.b32.xlu0 %v374, 64
    %v543 = vpop.permute.xlu0 %542
    %544 = vrot.lane.b32.xlu0 %v375, 64
    %v545 = vpop.permute.xlu0 %544
    %546 = vrot.lane.b32.xlu0 %v376, 64
    %v547 = vpop.permute.xlu0 %546
    %548 = vrot.lane.b32.xlu0 %v377, 64
    %v549 = vpop.permute.xlu0 %548
    %vm554 = vcmask 261120
    %v555 = vsel %vm554, %v112, %v383
    %v556 = vsel %vm554, %v113, %v385
    %v557 = vsel %vm554, %v114, %v387
    %v558 = vsel %vm554, %v115, %v389
    %vm559 = vcmask 523264
    %v560 = vsel %vm559, %v555, %v399
    %v561 = vsel %vm559, %v556, %v401
    %v562 = vsel %vm559, %v557, %v403
    %v563 = vsel %vm559, %v558, %v405
    %vm564 = vcmask 785408
    %v565 = vsel %vm564, %v560, %v415
    %v566 = vsel %vm564, %v561, %v417
    %v567 = vsel %vm564, %v562, %v419
    %v568 = vsel %vm564, %v563, %v421
    %v569 = vsel %vm554, %v212, %v431
    %v570 = vsel %vm554, %v213, %v433
    %v571 = vsel %vm554, %v214, %v435
    %v572 = vsel %vm554, %v215, %v437
    %v573 = vsel %vm559, %v569, %v447
    %v574 = vsel %vm559, %v570, %v449
    %v575 = vsel %vm559, %v571, %v451
    %v576 = vsel %vm559, %v572, %v453
    %v577 = vsel %vm564, %v573, %v463
    %v578 = vsel %vm564, %v574, %v465
    %v579 = vsel %vm564, %v575, %v467
    %v580 = vsel %vm564, %v576, %v469
    %v581 = vsel %vm554, %v278, %v479
    %v582 = vsel %vm554, %v279, %v481
    %v583 = vsel %vm554, %v280, %v483
    %v584 = vsel %vm554, %v281, %v485
    %v585 = vsel %vm559, %v581, %v495
    %v586 = vsel %vm559, %v582, %v497
    %v587 = vsel %vm559, %v583, %v499
    %v588 = vsel %vm559, %v584, %v501
    %v589 = vsel %vm564, %v585, %v511
    %v590 = vsel %vm564, %v586, %v513
    %v591 = vsel %vm564, %v587, %v515
    %v592 = vsel %vm564, %v588, %v517
    %v593 = vsel %vm554, %v342, %v527
    %v594 = vsel %vm554, %v343, %v529
    %v595 = vsel %vm554, %v344, %v531
    %v596 = vsel %vm554, %v345, %v533
    %v597 = vsel %vm559, %v593, %v543
    %v598 = vsel %vm559, %v594, %v545
    %v599 = vsel %vm559, %v595, %v547
    %v600 = vsel %vm559, %v596, %v549
    %v601 = vpack.c.bf16 %v566, %v565
    %v602 = vpack.c.bf16 %v578, %v577
    %v603 = vpack.c.bf16 %v590, %v589
    %v604 = vpack.c.bf16 %v598, %v597
    %v605 = vpack.c.bf16 %v568, %v567
    %v606 = vpack.c.bf16 %v580, %v579
    %v607 = vpack.c.bf16 %v592, %v591
    %v608 = vpack.c.bf16 %v600, %v599
    %v609 = vld [vmem:[%s1] sm:$0xf]
    %v610 = vld [vmem:[%s1 + $0x4] sm:$0xf]
    %v611 = vld [vmem:[%s1 + $0x8] sm:$0xf]
    %v612 = vld [vmem:[%s1 + $0xc] sm:$0xf]
    %v613 = vld [vmem:[%s1 + $0x10] sm:$0xf]
    %v614 = vld [vmem:[%s1 + $0x14] sm:$0xf]
    %v615 = vld [vmem:[%s1 + $0x18] sm:$0xf]
    %v616 = vld [vmem:[%s1 + $0x1c] sm:$0xf]
    %v617 = vld [vmem:[%s1 + $0x20] sm:$0xf]
    %v618 = vld [vmem:[%s1 + $0x24] sm:$0xf]
    %v619 = vld [vmem:[%s1 + $0x28] sm:$0xf]
    %v620 = vld [vmem:[%s1 + $0x2c] sm:$0xf]
    %v621 = vld [vmem:[%s1 + $0x30] sm:$0xf]
    %v622 = vld [vmem:[%s1 + $0x34] sm:$0xf]
    %v623 = vld [vmem:[%s1 + $0x38] sm:$0xf]
    %v624 = vld [vmem:[%s1 + $0x3c] sm:$0xf]
    %v625 = vld [vmem:[%s1 + $0x40] sm:$0xf]
    %v626 = vld [vmem:[%s1 + $0x44] sm:$0xf]
    %v627 = vld [vmem:[%s1 + $0x48] sm:$0xf]
    %v628 = vld [vmem:[%s1 + $0x4c] sm:$0xf]
    %v629 = vld [vmem:[%s1 + $0x50] sm:$0xf]
    %v630 = vld [vmem:[%s1 + $0x54] sm:$0xf]
    %v631 = vld [vmem:[%s1 + $0x58] sm:$0xf]
    %v632 = vld [vmem:[%s1 + $0x5c] sm:$0xf]
    %v633 = vld [vmem:[%s1 + $0x60] sm:$0xf]
    %v634 = vld [vmem:[%s1 + $0x64] sm:$0xf]
    %v635 = vld [vmem:[%s1 + $0x68] sm:$0xf]
    %v636 = vld [vmem:[%s1 + $0x6c] sm:$0xf]
    %v637 = vld [vmem:[%s1 + $0x70] sm:$0xf]
    %v638 = vld [vmem:[%s1 + $0x74] sm:$0xf]
    %v639 = vld [vmem:[%s1 + $0x78] sm:$0xf]
    %v640 = vld [vmem:[%s1 + $0x7c] sm:$0xf]
    %v641 = vld [vmem:[%s1 + $0x80] sm:$0xf]
    %v642 = vld [vmem:[%s1 + $0x84] sm:$0xf]
    %v643 = vld [vmem:[%s1 + $0x88] sm:$0xf]
    %v644 = vld [vmem:[%s1 + $0x8c] sm:$0xf]
    %v645 = vld [vmem:[%s1 + $0x90] sm:$0xf]
    %v646 = vld [vmem:[%s1 + $0x94] sm:$0xf]
    %v647 = vld [vmem:[%s1 + $0x98] sm:$0xf]
    %v648 = vld [vmem:[%s1 + $0x9c] sm:$0xf]
    %v649 = vld [vmem:[%s1 + $0xa0] sm:$0xf]
    %v650 = vld [vmem:[%s1 + $0xa4] sm:$0xf]
    %v651 = vld [vmem:[%s1 + $0xa8] sm:$0xf]
    %v652 = vld [vmem:[%s1 + $0xac] sm:$0xf]
    %v653 = vld [vmem:[%s1 + $0xb0] sm:$0xf]
    %v654 = vld [vmem:[%s1 + $0xb4] sm:$0xf]
    %v655 = vld [vmem:[%s1 + $0xb8] sm:$0xf]
    %v656 = vld [vmem:[%s1 + $0xbc] sm:$0xf]
    %v657 = vld [vmem:[%s1 + $0xc0] sm:$0xf]
    %v658 = vld [vmem:[%s1 + $0xc4] sm:$0xf]
    %v659 = vld [vmem:[%s1 + $0xc8] sm:$0xf]
    %v660 = vld [vmem:[%s1 + $0xcc] sm:$0xf]
    %v661 = vld [vmem:[%s1 + $0xd0] sm:$0xf]
    %v662 = vld [vmem:[%s1 + $0xd4] sm:$0xf]
    %v663 = vld [vmem:[%s1 + $0xd8] sm:$0xf]
    %v664 = vld [vmem:[%s1 + $0xdc] sm:$0xf]
    %v665 = vld [vmem:[%s1 + $0xe0] sm:$0xf]
    %v666 = vld [vmem:[%s1 + $0xe4] sm:$0xf]
    %v667 = vld [vmem:[%s1 + $0xe8] sm:$0xf]
    %v668 = vld [vmem:[%s1 + $0xec] sm:$0xf]
    %v669 = vld [vmem:[%s2] sm:$0x1]
    %v671 = vperm.slane %v669, 0
    %v733 = vunpack.c.l.b16 %v609
    %v734 = vunpack.c.l.b16 %v610
    %v735 = vunpack.c.l.b16 %v611
    %v736 = vunpack.c.l.b16 %v612
    %v737 = vunpack.c.l.b16 %v613
    %v738 = vunpack.c.l.b16 %v614
    %v739 = vunpack.c.l.b16 %v615
    %v740 = vunpack.c.l.b16 %v616
    %v741 = vunpack.c.l.b16 %v617
    %v742 = vunpack.c.l.b16 %v618
    %v743 = vunpack.c.l.b16 %v619
    %v744 = vunpack.c.l.b16 %v620
    %v745 = vunpack.c.l.b16 %v621
    %v746 = vunpack.c.l.b16 %v622
    %v747 = vunpack.c.l.b16 %v623
    %v748 = vunpack.c.l.b16 %v624
    %v749 = vunpack.c.l.b16 %v625
    %v750 = vunpack.c.l.b16 %v626
    %v751 = vunpack.c.l.b16 %v627
    %v752 = vunpack.c.l.b16 %v628
    %v753 = vunpack.c.l.b16 %v629
    %v754 = vunpack.c.l.b16 %v630
    %v755 = vunpack.c.l.b16 %v631
    %v756 = vunpack.c.l.b16 %v632
    %v757 = vunpack.c.l.b16 %v633
    %v758 = vunpack.c.l.b16 %v634
    %v759 = vunpack.c.l.b16 %v635
    %v760 = vunpack.c.l.b16 %v636
    %v761 = vunpack.c.l.b16 %v637
    %v762 = vunpack.c.l.b16 %v638
    %v763 = vunpack.c.l.b16 %v639
    %v764 = vunpack.c.l.b16 %v640
    %v765 = vunpack.c.l.b16 %v641
    %v766 = vunpack.c.l.b16 %v642
    %v767 = vunpack.c.l.b16 %v643
    %v768 = vunpack.c.l.b16 %v644
    %v769 = vunpack.c.l.b16 %v645
    %v770 = vunpack.c.l.b16 %v646
    %v771 = vunpack.c.l.b16 %v647
    %v772 = vunpack.c.l.b16 %v648
    %v773 = vunpack.c.l.b16 %v649
    %v774 = vunpack.c.l.b16 %v650
    %v775 = vunpack.c.l.b16 %v651
    %v776 = vunpack.c.l.b16 %v652
    %v777 = vunpack.c.l.b16 %v653
    %v778 = vunpack.c.l.b16 %v654
    %v779 = vunpack.c.l.b16 %v655
    %v780 = vunpack.c.l.b16 %v656
    %v781 = vunpack.c.l.b16 %v657
    %v782 = vunpack.c.l.b16 %v658
    %v783 = vunpack.c.l.b16 %v659
    %v784 = vunpack.c.l.b16 %v660
    %v785 = vunpack.c.l.b16 %v661
    %v786 = vunpack.c.l.b16 %v662
    %v787 = vunpack.c.l.b16 %v663
    %v788 = vunpack.c.l.b16 %v664
    %v789 = vunpack.c.l.b16 %v665
    %v790 = vunpack.c.l.b16 %v666
    %v791 = vunpack.c.l.b16 %v667
    %v792 = vunpack.c.l.b16 %v668
    %v793 = vpack.c.b16 %v734, %v733
    %v794 = vpack.c.b16 %v736, %v735
    %v795 = vpack.c.b16 %v738, %v737
    %v796 = vpack.c.b16 %v740, %v739
    %v797 = vpack.c.b16 %v742, %v741
    %v798 = vpack.c.b16 %v744, %v743
    %v799 = vpack.c.b16 %v746, %v745
    %v800 = vpack.c.b16 %v748, %v747
    %v801 = vpack.c.b16 %v750, %v749
    %v802 = vpack.c.b16 %v752, %v751
    %v803 = vpack.c.b16 %v754, %v753
    %v804 = vpack.c.b16 %v756, %v755
    %v805 = vpack.c.b16 %v758, %v757
    %v806 = vpack.c.b16 %v760, %v759
    %v807 = vpack.c.b16 %v762, %v761
    %v808 = vpack.c.b16 %v764, %v763
    %v809 = vpack.c.b16 %v766, %v765
    %v810 = vpack.c.b16 %v768, %v767
    %v811 = vpack.c.b16 %v770, %v769
    %v812 = vpack.c.b16 %v772, %v771
    %v813 = vpack.c.b16 %v774, %v773
    %v814 = vpack.c.b16 %v776, %v775
    %v815 = vpack.c.b16 %v778, %v777
    %v816 = vpack.c.b16 %v780, %v779
    %v817 = vpack.c.b16 %v782, %v781
    %v818 = vpack.c.b16 %v784, %v783
    %v819 = vpack.c.b16 %v786, %v785
    %v820 = vpack.c.b16 %v788, %v787
    %v821 = vpack.c.b16 %v790, %v789
    %v822 = vpack.c.b16 %v792, %v791
    %v854 = vsel %vm564, %v604, 0
    %v857 = vsel %vm564, %v608, 0
    %859 = vmatpush.bf16.msra.mxu0 %v800
    %860 = vmatpush.bf16.msra.mxu0 %v799
    %861 = vmatpush.bf16.msra.mxu0 %v798
    %862 = vmatpush.bf16.msra.mxu0 %v797
    %863 = vmatpush.bf16.msra.mxu0 %v796
    %864 = vmatpush.bf16.msra.mxu0 %v795
    %865 = vmatpush.bf16.msra.mxu0 %v794
    %866 = vmatpush.bf16.msra.mxu0 %v793
    %867 = vmatmul.bf16.gmra.mxu0 %v601
    %v868 = vpop.f32.mrf.mxu0
    %v869 = vadd.f32 %v671, %v868
    %v870 = vpop.f32.mrf.mxu0
    %v871 = vadd.f32 %v671, %v870
    %872 = vmatmul.bf16.gmra.mxu0 %v605
    %v873 = vpop.f32.mrf.mxu0
    %v874 = vadd.f32 %v671, %v873
    %v875 = vpop.f32.mrf.mxu0
    %v876 = vadd.f32 %v671, %v875
    %877 = vdwg.mxu0
    %878 = vmatpush.bf16.msra.mxu0 %v808
    %879 = vmatpush.bf16.msra.mxu0 %v807
    %880 = vmatpush.bf16.msra.mxu0 %v806
    %881 = vmatpush.bf16.msra.mxu0 %v805
    %882 = vmatpush.bf16.msra.mxu0 %v804
    %883 = vmatpush.bf16.msra.mxu0 %v803
    %884 = vmatpush.bf16.msra.mxu0 %v802
    %885 = vmatpush.bf16.msra.mxu0 %v801
    %886 = vmatmul.bf16.gmra.mxu0 %v602
    %v887 = vpop.f32.mrf.mxu0
    %v888 = vadd.f32 %v869, %v887
    %v889 = vpop.f32.mrf.mxu0
    %v890 = vadd.f32 %v871, %v889
    %891 = vmatmul.bf16.gmra.mxu0 %v606
    %v892 = vpop.f32.mrf.mxu0
    %v893 = vadd.f32 %v874, %v892
    %v894 = vpop.f32.mrf.mxu0
    %v895 = vadd.f32 %v876, %v894
    %896 = vdwg.mxu0
    %897 = vmatpush.bf16.msra.mxu0 %v816
    %898 = vmatpush.bf16.msra.mxu0 %v815
    %899 = vmatpush.bf16.msra.mxu0 %v814
    %900 = vmatpush.bf16.msra.mxu0 %v813
    %901 = vmatpush.bf16.msra.mxu0 %v812
    %902 = vmatpush.bf16.msra.mxu0 %v811
    %903 = vmatpush.bf16.msra.mxu0 %v810
    %904 = vmatpush.bf16.msra.mxu0 %v809
    %905 = vmatmul.bf16.gmra.mxu0 %v603
    %v906 = vpop.f32.mrf.mxu0
    %v907 = vadd.f32 %v888, %v906
    %v908 = vpop.f32.mrf.mxu0
    %v909 = vadd.f32 %v890, %v908
    %910 = vmatmul.bf16.gmra.mxu0 %v607
    %v911 = vpop.f32.mrf.mxu0
    %v912 = vadd.f32 %v893, %v911
    %v913 = vpop.f32.mrf.mxu0
    %v914 = vadd.f32 %v895, %v913
    %915 = vdwg.mxu0
    %916 = vmatpush.bf16.msra.mxu0 0
    %917 = vmatpush.bf16.msra.mxu0 0
    %918 = vmatpush.bf16.msra.mxu0 %v822
    %919 = vmatpush.bf16.msra.mxu0 %v821
    %920 = vmatpush.bf16.msra.mxu0 %v820
    %921 = vmatpush.bf16.msra.mxu0 %v819
    %922 = vmatpush.bf16.msra.mxu0 %v818
    %923 = vmatpush.bf16.msra.mxu0 %v817
    %924 = vmatmul.bf16.gmra.mxu0 %v854
    %v925 = vpop.f32.mrf.mxu0
    %v926 = vadd.f32 %v907, %v925
    %v927 = vpop.f32.mrf.mxu0
    %v928 = vadd.f32 %v909, %v927
    %929 = vmatmul.bf16.gmra.mxu0 %v857
    %v930 = vpop.f32.mrf.mxu0
    %v931 = vadd.f32 %v912, %v930
    %v932 = vpop.f32.mrf.mxu0
    %v933 = vadd.f32 %v914, %v932
    %934 = vdwg.mxu0
    %v935 = vtanh.pop %v926
    %v936 = vtanh.pop %v928
    %v937 = vtanh.pop %v931
    %v938 = vtanh.pop %v933
    %v939 = vrot.slane %v935, 6
    %v940 = vrot.slane %v936, 6
    %v941 = vrot.slane %v937, 6
    %v942 = vrot.slane %v938, 6
    %v943 = vsel %vm220, %v941, %v942
    %v944 = vsel %vm220, %v940, %v941
    %v945 = vsel %vm220, %v939, %v940
    %v946 = vsel %vm220, %v942, %v939
    %v947 = vsel %vm233, %v946, 0.0
    %v948 = vsel %vm234, %v945, 0.0
    %v949 = vsel %vm235, %v944, 0.0
    %v950 = vsel %vm236, %v943, 0.0
    %v951 = vrot.slane %v935, 7
    %v952 = vrot.slane %v936, 7
    %v953 = vrot.slane %v937, 7
    %v954 = vrot.slane %v938, 7
    %v955 = vsel %vm245, %v953, %v954
    %v956 = vsel %vm245, %v952, %v953
    %v957 = vsel %vm245, %v951, %v952
    %v958 = vsel %vm245, %v954, %v951
    %v959 = vsel %vm258, %v958, 0.0
    %v960 = vsel %vm259, %v957, 0.0
    %v961 = vsel %vm260, %v956, 0.0
    %v962 = vsel %vm261, %v955, 0.0
    %v963 = vrot.slane %v935, 1
    %v964 = vrot.slane %v936, 1
    %v965 = vrot.slane %v937, 1
    %v966 = vrot.slane %v938, 1
    %v967 = vsel %vm95, %v965, %v966
    %v968 = vsel %vm95, %v964, %v965
    %v969 = vsel %vm95, %v963, %v964
    %v970 = vsel %vm95, %v966, %v963
    %v971 = vsel %vm274, %v969, 0.0
    %v972 = vsel %vm275, %v968, 0.0
    %v973 = vsel %vm276, %v967, 0.0
    %v974 = vsel %vm277, %v970, 0.0
    %v975 = vrot.slane %v935, 2
    %v976 = vrot.slane %v936, 2
    %v977 = vrot.slane %v937, 2
    %v978 = vrot.slane %v938, 2
    %v979 = vsel %vm120, %v977, %v978
    %v980 = vsel %vm120, %v976, %v977
    %v981 = vsel %vm120, %v975, %v976
    %v982 = vsel %vm120, %v978, %v975
    %v983 = vsel %vm290, %v981, 0.0
    %v984 = vsel %vm291, %v980, 0.0
    %v985 = vsel %vm292, %v979, 0.0
    %v986 = vsel %vm293, %v982, 0.0
    %v987 = vpack.c.bf16 %v948, %v947
    %v988 = vpack.c.bf16 %v960, %v959
    %v989 = vpack.c.bf16 %v936, %v935
    %v990 = vpack.c.bf16 %v972, %v971
    %v991 = vpack.c.bf16 %v984, %v983
    %v992 = vpack.c.bf16 %v950, %v949
    %v993 = vpack.c.bf16 %v962, %v961
    %v994 = vpack.c.bf16 %v938, %v937
    %v995 = vpack.c.bf16 %v974, %v973
    %v996 = vpack.c.bf16 %v986, %v985
    %v997 = vld [vmem:[%s3] sm:$0xf]
    %v998 = vld [vmem:[%s3 + $0x4] sm:$0xf]
    %v999 = vld [vmem:[%s3 + $0x8] sm:$0xf]
    %v1000 = vld [vmem:[%s3 + $0xc] sm:$0xf]
    %v1001 = vld [vmem:[%s3 + $0x10] sm:$0xf]
    %v1002 = vld [vmem:[%s3 + $0x14] sm:$0xf]
    %v1003 = vld [vmem:[%s3 + $0x18] sm:$0xf]
    %v1004 = vld [vmem:[%s3 + $0x1c] sm:$0xf]
    %v1005 = vld [vmem:[%s3 + $0x20] sm:$0xf]
    %v1006 = vld [vmem:[%s3 + $0x24] sm:$0xf]
    %v1007 = vld [vmem:[%s3 + $0x28] sm:$0xf]
    %v1008 = vld [vmem:[%s3 + $0x2c] sm:$0xf]
    %v1009 = vld [vmem:[%s3 + $0x30] sm:$0xf]
    %v1010 = vld [vmem:[%s3 + $0x34] sm:$0xf]
    %v1011 = vld [vmem:[%s3 + $0x38] sm:$0xf]
    %v1012 = vld [vmem:[%s3 + $0x3c] sm:$0xf]
    %v1013 = vld [vmem:[%s3 + $0x40] sm:$0xf]
    %v1014 = vld [vmem:[%s3 + $0x44] sm:$0xf]
    %v1015 = vld [vmem:[%s3 + $0x48] sm:$0xf]
    %v1016 = vld [vmem:[%s3 + $0x4c] sm:$0xf]
    %v1017 = vld [vmem:[%s3 + $0x50] sm:$0xf]
    %v1018 = vld [vmem:[%s3 + $0x54] sm:$0xf]
    %v1019 = vld [vmem:[%s3 + $0x58] sm:$0xf]
    %v1020 = vld [vmem:[%s3 + $0x5c] sm:$0xf]
    %v1021 = vld [vmem:[%s3 + $0x60] sm:$0xf]
    %v1022 = vld [vmem:[%s3 + $0x64] sm:$0xf]
    %v1023 = vld [vmem:[%s3 + $0x68] sm:$0xf]
    %v1024 = vld [vmem:[%s3 + $0x6c] sm:$0xf]
    %v1025 = vld [vmem:[%s3 + $0x70] sm:$0xf]
    %v1026 = vld [vmem:[%s3 + $0x74] sm:$0xf]
    %v1027 = vld [vmem:[%s3 + $0x78] sm:$0xf]
    %v1028 = vld [vmem:[%s3 + $0x7c] sm:$0xf]
    %v1029 = vld [vmem:[%s3 + $0x80] sm:$0xf]
    %v1030 = vld [vmem:[%s3 + $0x84] sm:$0xf]
    %v1031 = vld [vmem:[%s3 + $0x88] sm:$0xf]
    %v1032 = vld [vmem:[%s3 + $0x8c] sm:$0xf]
    %v1033 = vld [vmem:[%s3 + $0x90] sm:$0xf]
    %v1034 = vld [vmem:[%s3 + $0x94] sm:$0xf]
    %v1035 = vld [vmem:[%s3 + $0x98] sm:$0xf]
    %v1036 = vld [vmem:[%s3 + $0x9c] sm:$0xf]
    %v1037 = vld [vmem:[%s3 + $0xa0] sm:$0xf]
    %v1038 = vld [vmem:[%s3 + $0xa4] sm:$0xf]
    %v1039 = vld [vmem:[%s3 + $0xa8] sm:$0xf]
    %v1040 = vld [vmem:[%s3 + $0xac] sm:$0xf]
    %v1041 = vld [vmem:[%s3 + $0xb0] sm:$0xf]
    %v1042 = vld [vmem:[%s3 + $0xb4] sm:$0xf]
    %v1043 = vld [vmem:[%s3 + $0xb8] sm:$0xf]
    %v1044 = vld [vmem:[%s3 + $0xbc] sm:$0xf]
    %v1045 = vld [vmem:[%s3 + $0xc0] sm:$0xf]
    %v1046 = vld [vmem:[%s3 + $0xc4] sm:$0xf]
    %v1047 = vld [vmem:[%s3 + $0xc8] sm:$0xf]
    %v1048 = vld [vmem:[%s3 + $0xcc] sm:$0xf]
    %v1049 = vld [vmem:[%s3 + $0xd0] sm:$0xf]
    %v1050 = vld [vmem:[%s3 + $0xd4] sm:$0xf]
    %v1051 = vld [vmem:[%s3 + $0xd8] sm:$0xf]
    %v1052 = vld [vmem:[%s3 + $0xdc] sm:$0xf]
    %v1053 = vld [vmem:[%s3 + $0xe0] sm:$0xf]
    %v1054 = vld [vmem:[%s3 + $0xe4] sm:$0xf]
    %v1055 = vld [vmem:[%s3 + $0xe8] sm:$0xf]
    %v1056 = vld [vmem:[%s3 + $0xec] sm:$0xf]
    %v1057 = vld [vmem:[%s3 + $0xf0] sm:$0xf]
    %v1058 = vld [vmem:[%s3 + $0xf4] sm:$0xf]
    %v1059 = vld [vmem:[%s3 + $0xf8] sm:$0xf]
    %v1060 = vld [vmem:[%s3 + $0xfc] sm:$0xf]
    %v1061 = vld [vmem:[%s3 + $0x100] sm:$0xf]
    %v1062 = vld [vmem:[%s3 + $0x104] sm:$0xf]
    %v1063 = vld [vmem:[%s3 + $0x108] sm:$0xf]
    %v1064 = vld [vmem:[%s3 + $0x10c] sm:$0xf]
    %v1065 = vld [vmem:[%s3 + $0x110] sm:$0xf]
    %v1066 = vld [vmem:[%s3 + $0x114] sm:$0xf]
    %v1067 = vld [vmem:[%s3 + $0x118] sm:$0xf]
    %v1068 = vld [vmem:[%s3 + $0x11c] sm:$0xf]
    %v1069 = vld [vmem:[%s3 + $0x120] sm:$0xf]
    %v1070 = vld [vmem:[%s3 + $0x124] sm:$0xf]
    %v1071 = vld [vmem:[%s3 + $0x128] sm:$0xf]
    %v1072 = vld [vmem:[%s3 + $0x12c] sm:$0xf]
    %v1073 = vld [vmem:[%s3 + $0x130] sm:$0xf]
    %v1074 = vld [vmem:[%s3 + $0x134] sm:$0xf]
    %v1075 = vld [vmem:[%s3 + $0x138] sm:$0xf]
    %v1076 = vld [vmem:[%s3 + $0x13c] sm:$0xf]
    %v1077 = vld [vmem:[%s4] sm:$0x1]
    %v1079 = vperm.slane %v1077, 0
    %v1161 = vunpack.c.l.b16 %v997
    %v1162 = vunpack.c.l.b16 %v998
    %v1163 = vunpack.c.l.b16 %v999
    %v1164 = vunpack.c.l.b16 %v1000
    %v1165 = vunpack.c.l.b16 %v1001
    %v1166 = vunpack.c.l.b16 %v1002
    %v1167 = vunpack.c.l.b16 %v1003
    %v1168 = vunpack.c.l.b16 %v1004
    %v1169 = vunpack.c.l.b16 %v1005
    %v1170 = vunpack.c.l.b16 %v1006
    %v1171 = vunpack.c.l.b16 %v1007
    %v1172 = vunpack.c.l.b16 %v1008
    %v1173 = vunpack.c.l.b16 %v1009
    %v1174 = vunpack.c.l.b16 %v1010
    %v1175 = vunpack.c.l.b16 %v1011
    %v1176 = vunpack.c.l.b16 %v1012
    %v1177 = vunpack.c.l.b16 %v1013
    %v1178 = vunpack.c.l.b16 %v1014
    %v1179 = vunpack.c.l.b16 %v1015
    %v1180 = vunpack.c.l.b16 %v1016
    %v1181 = vunpack.c.l.b16 %v1017
    %v1182 = vunpack.c.l.b16 %v1018
    %v1183 = vunpack.c.l.b16 %v1019
    %v1184 = vunpack.c.l.b16 %v1020
    %v1185 = vunpack.c.l.b16 %v1021
    %v1186 = vunpack.c.l.b16 %v1022
    %v1187 = vunpack.c.l.b16 %v1023
    %v1188 = vunpack.c.l.b16 %v1024
    %v1189 = vunpack.c.l.b16 %v1025
    %v1190 = vunpack.c.l.b16 %v1026
    %v1191 = vunpack.c.l.b16 %v1027
    %v1192 = vunpack.c.l.b16 %v1028
    %v1193 = vunpack.c.l.b16 %v1029
    %v1194 = vunpack.c.l.b16 %v1030
    %v1195 = vunpack.c.l.b16 %v1031
    %v1196 = vunpack.c.l.b16 %v1032
    %v1197 = vunpack.c.l.b16 %v1033
    %v1198 = vunpack.c.l.b16 %v1034
    %v1199 = vunpack.c.l.b16 %v1035
    %v1200 = vunpack.c.l.b16 %v1036
    %v1201 = vunpack.c.l.b16 %v1037
    %v1202 = vunpack.c.l.b16 %v1038
    %v1203 = vunpack.c.l.b16 %v1039
    %v1204 = vunpack.c.l.b16 %v1040
    %v1205 = vunpack.c.l.b16 %v1041
    %v1206 = vunpack.c.l.b16 %v1042
    %v1207 = vunpack.c.l.b16 %v1043
    %v1208 = vunpack.c.l.b16 %v1044
    %v1209 = vunpack.c.l.b16 %v1045
    %v1210 = vunpack.c.l.b16 %v1046
    %v1211 = vunpack.c.l.b16 %v1047
    %v1212 = vunpack.c.l.b16 %v1048
    %v1213 = vunpack.c.l.b16 %v1049
    %v1214 = vunpack.c.l.b16 %v1050
    %v1215 = vunpack.c.l.b16 %v1051
    %v1216 = vunpack.c.l.b16 %v1052
    %v1217 = vunpack.c.l.b16 %v1053
    %v1218 = vunpack.c.l.b16 %v1054
    %v1219 = vunpack.c.l.b16 %v1055
    %v1220 = vunpack.c.l.b16 %v1056
    %v1221 = vunpack.c.l.b16 %v1057
    %v1222 = vunpack.c.l.b16 %v1058
    %v1223 = vunpack.c.l.b16 %v1059
    %v1224 = vunpack.c.l.b16 %v1060
    %v1225 = vunpack.c.l.b16 %v1061
    %v1226 = vunpack.c.l.b16 %v1062
    %v1227 = vunpack.c.l.b16 %v1063
    %v1228 = vunpack.c.l.b16 %v1064
    %v1229 = vunpack.c.l.b16 %v1065
    %v1230 = vunpack.c.l.b16 %v1066
    %v1231 = vunpack.c.l.b16 %v1067
    %v1232 = vunpack.c.l.b16 %v1068
    %v1233 = vunpack.c.l.b16 %v1069
    %v1234 = vunpack.c.l.b16 %v1070
    %v1235 = vunpack.c.l.b16 %v1071
    %v1236 = vunpack.c.l.b16 %v1072
    %v1237 = vunpack.c.l.b16 %v1073
    %v1238 = vunpack.c.l.b16 %v1074
    %v1239 = vunpack.c.l.b16 %v1075
    %v1240 = vunpack.c.l.b16 %v1076
    %v1241 = vpack.c.b16 %v1162, %v1161
    %v1242 = vpack.c.b16 %v1164, %v1163
    %v1243 = vpack.c.b16 %v1166, %v1165
    %v1244 = vpack.c.b16 %v1168, %v1167
    %v1245 = vpack.c.b16 %v1170, %v1169
    %v1246 = vpack.c.b16 %v1172, %v1171
    %v1247 = vpack.c.b16 %v1174, %v1173
    %v1248 = vpack.c.b16 %v1176, %v1175
    %v1249 = vpack.c.b16 %v1178, %v1177
    %v1250 = vpack.c.b16 %v1180, %v1179
    %v1251 = vpack.c.b16 %v1182, %v1181
    %v1252 = vpack.c.b16 %v1184, %v1183
    %v1253 = vpack.c.b16 %v1186, %v1185
    %v1254 = vpack.c.b16 %v1188, %v1187
    %v1255 = vpack.c.b16 %v1190, %v1189
    %v1256 = vpack.c.b16 %v1192, %v1191
    %v1257 = vpack.c.b16 %v1194, %v1193
    %v1258 = vpack.c.b16 %v1196, %v1195
    %v1259 = vpack.c.b16 %v1198, %v1197
    %v1260 = vpack.c.b16 %v1200, %v1199
    %v1261 = vpack.c.b16 %v1202, %v1201
    %v1262 = vpack.c.b16 %v1204, %v1203
    %v1263 = vpack.c.b16 %v1206, %v1205
    %v1264 = vpack.c.b16 %v1208, %v1207
    %v1265 = vpack.c.b16 %v1210, %v1209
    %v1266 = vpack.c.b16 %v1212, %v1211
    %v1267 = vpack.c.b16 %v1214, %v1213
    %v1268 = vpack.c.b16 %v1216, %v1215
    %v1269 = vpack.c.b16 %v1218, %v1217
    %v1270 = vpack.c.b16 %v1220, %v1219
    %v1271 = vpack.c.b16 %v1222, %v1221
    %v1272 = vpack.c.b16 %v1224, %v1223
    %v1273 = vpack.c.b16 %v1226, %v1225
    %v1274 = vpack.c.b16 %v1228, %v1227
    %v1275 = vpack.c.b16 %v1230, %v1229
    %v1276 = vpack.c.b16 %v1232, %v1231
    %v1277 = vpack.c.b16 %v1234, %v1233
    %v1278 = vpack.c.b16 %v1236, %v1235
    %v1279 = vpack.c.b16 %v1238, %v1237
    %v1280 = vpack.c.b16 %v1240, %v1239
    %1321 = vmatpush.bf16.msra.mxu0 %v1248
    %1322 = vmatpush.bf16.msra.mxu0 %v1247
    %1323 = vmatpush.bf16.msra.mxu0 %v1246
    %1324 = vmatpush.bf16.msra.mxu0 %v1245
    %1325 = vmatpush.bf16.msra.mxu0 %v1244
    %1326 = vmatpush.bf16.msra.mxu0 %v1243
    %1327 = vmatpush.bf16.msra.mxu0 %v1242
    %1328 = vmatpush.bf16.msra.mxu0 %v1241
    %1329 = vmatmul.bf16.gmra.mxu0 %v987
    %v1330 = vpop.f32.mrf.mxu0
    %v1331 = vadd.f32 %v1079, %v1330
    %v1332 = vpop.f32.mrf.mxu0
    %v1333 = vadd.f32 %v1079, %v1332
    %1334 = vmatmul.bf16.gmra.mxu0 %v992
    %v1335 = vpop.f32.mrf.mxu0
    %v1336 = vadd.f32 %v1079, %v1335
    %v1337 = vpop.f32.mrf.mxu0
    %v1338 = vadd.f32 %v1079, %v1337
    %1339 = vdwg.mxu0
    %1340 = vmatpush.bf16.msra.mxu0 %v1256
    %1341 = vmatpush.bf16.msra.mxu0 %v1255
    %1342 = vmatpush.bf16.msra.mxu0 %v1254
    %1343 = vmatpush.bf16.msra.mxu0 %v1253
    %1344 = vmatpush.bf16.msra.mxu0 %v1252
    %1345 = vmatpush.bf16.msra.mxu0 %v1251
    %1346 = vmatpush.bf16.msra.mxu0 %v1250
    %1347 = vmatpush.bf16.msra.mxu0 %v1249
    %1348 = vmatmul.bf16.gmra.mxu0 %v988
    %v1349 = vpop.f32.mrf.mxu0
    %v1350 = vadd.f32 %v1331, %v1349
    %v1351 = vpop.f32.mrf.mxu0
    %v1352 = vadd.f32 %v1333, %v1351
    %1353 = vmatmul.bf16.gmra.mxu0 %v993
    %v1354 = vpop.f32.mrf.mxu0
    %v1355 = vadd.f32 %v1336, %v1354
    %v1356 = vpop.f32.mrf.mxu0
    %v1357 = vadd.f32 %v1338, %v1356
    %1358 = vdwg.mxu0
    %1359 = vmatpush.bf16.msra.mxu0 %v1264
    %1360 = vmatpush.bf16.msra.mxu0 %v1263
    %1361 = vmatpush.bf16.msra.mxu0 %v1262
    %1362 = vmatpush.bf16.msra.mxu0 %v1261
    %1363 = vmatpush.bf16.msra.mxu0 %v1260
    %1364 = vmatpush.bf16.msra.mxu0 %v1259
    %1365 = vmatpush.bf16.msra.mxu0 %v1258
    %1366 = vmatpush.bf16.msra.mxu0 %v1257
    %1367 = vmatmul.bf16.gmra.mxu0 %v989
    %v1368 = vpop.f32.mrf.mxu0
    %v1369 = vadd.f32 %v1350, %v1368
    %v1370 = vpop.f32.mrf.mxu0
    %v1371 = vadd.f32 %v1352, %v1370
    %1372 = vmatmul.bf16.gmra.mxu0 %v994
    %v1373 = vpop.f32.mrf.mxu0
    %v1374 = vadd.f32 %v1355, %v1373
    %v1375 = vpop.f32.mrf.mxu0
    %v1376 = vadd.f32 %v1357, %v1375
    %1377 = vdwg.mxu0
    %1378 = vmatpush.bf16.msra.mxu0 %v1272
    %1379 = vmatpush.bf16.msra.mxu0 %v1271
    %1380 = vmatpush.bf16.msra.mxu0 %v1270
    %1381 = vmatpush.bf16.msra.mxu0 %v1269
    %1382 = vmatpush.bf16.msra.mxu0 %v1268
    %1383 = vmatpush.bf16.msra.mxu0 %v1267
    %1384 = vmatpush.bf16.msra.mxu0 %v1266
    %1385 = vmatpush.bf16.msra.mxu0 %v1265
    %1386 = vmatmul.bf16.gmra.mxu0 %v990
    %v1387 = vpop.f32.mrf.mxu0
    %v1388 = vadd.f32 %v1369, %v1387
    %v1389 = vpop.f32.mrf.mxu0
    %v1390 = vadd.f32 %v1371, %v1389
    %1391 = vmatmul.bf16.gmra.mxu0 %v995
    %v1392 = vpop.f32.mrf.mxu0
    %v1393 = vadd.f32 %v1374, %v1392
    %v1394 = vpop.f32.mrf.mxu0
    %v1395 = vadd.f32 %v1376, %v1394
    %1396 = vdwg.mxu0
    %1397 = vmatpush.bf16.msra.mxu0 %v1280
    %1398 = vmatpush.bf16.msra.mxu0 %v1279
    %1399 = vmatpush.bf16.msra.mxu0 %v1278
    %1400 = vmatpush.bf16.msra.mxu0 %v1277
    %1401 = vmatpush.bf16.msra.mxu0 %v1276
    %1402 = vmatpush.bf16.msra.mxu0 %v1275
    %1403 = vmatpush.bf16.msra.mxu0 %v1274
    %1404 = vmatpush.bf16.msra.mxu0 %v1273
    %1405 = vmatmul.bf16.gmra.mxu0 %v991
    %v1406 = vpop.f32.mrf.mxu0
    %v1407 = vadd.f32 %v1388, %v1406
    %v1408 = vpop.f32.mrf.mxu0
    %v1409 = vadd.f32 %v1390, %v1408
    %1410 = vmatmul.bf16.gmra.mxu0 %v996
    %v1411 = vpop.f32.mrf.mxu0
    %v1412 = vadd.f32 %v1393, %v1411
    %v1413 = vpop.f32.mrf.mxu0
    %v1414 = vadd.f32 %v1395, %v1413
    %1415 = vdwg.mxu0
    %v1416 = vtanh.pop %v1407
    %v1417 = vtanh.pop %v1409
    %v1418 = vtanh.pop %v1412
    %v1419 = vtanh.pop %v1414
    %v1420 = vld [vmem:[%s5] sm:$0x1]
    %v1421 = vld [vmem:[#allocation2] sm:$0x1]
    %1423 = vset.pattern.permute.xlu0 0
    %1424 = vperm.xlu0 %1423, %v1421
    %v1425 = vpop.permute.xlu0 %1424
    %v1427 = vperm.slane %v1425, 0
    %vm1428 = vcmask 130048
    %v1430 = vsel %vm1428, %v1420, 0
    %v1433 = vsel %vm1428, %v1416, 0
    %v1436 = vsel %vm1428, %v1417, 0
    %v1439 = vsel %vm1428, %v1418, 0
    %v1442 = vsel %vm1428, %v1419, 0
    %1444 = vmatpush.xpose.msra.mxu0 0.0
    %1445 = vmatpush.xpose.msra.mxu0 0.0
    %1446 = vmatpush.xpose.msra.mxu0 0.0
    %1447 = vmatpush.xpose.msra.mxu0 0.0
    %1448 = vmatpush.xpose.msra.mxu0 0.0
    %1449 = vmatpush.xpose.msra.mxu0 0.0
    %1450 = vmatpush.xpose.msra.mxu0 0.0
    %1451 = vmatpush.xpose.msra.mxu0 0.0
    %1452 = vmatpush.xpose.msra.mxu0 0.0
    %1453 = vmatpush.xpose.msra.mxu0 0.0
    %1454 = vmatpush.xpose.msra.mxu0 0.0
    %1455 = vmatpush.xpose.msra.mxu0 0.0
    %1456 = vmatpush.xpose.msra.mxu0 %v1442
    %1457 = vmatpush.xpose.msra.mxu0 %v1439
    %1458 = vmatpush.xpose.msra.mxu0 %v1436
    %1459 = vmatpush.xpose.msra.mxu0 %v1433
    %1460 = vmatmul.f32.gmra.mxu0 %v1430
    %v1461 = vpop.f32.mrf.mxu0
    %v1462 = vadd.f32 %v1427, %v1461
    %1463 = vdwg.mxu0
    %vm1464 = vcmask 253952
    %1465 = vst.msk [vmem:[#allocation3] sm:$0x1] %vm1464, %v1462
    // Predicated region
    $region30: #{tpu_custom_call.1} parent=1 // pred_check
      _
    $region31: #{tpu_custom_call.1} parent=1 // pred_check_branch
      %1467 = sbr.rel (0) target = $region33
    $region32: #{tpu_custom_call.1} parent=1 // pred_region
      %1469 = vsyncadd [#allocation4], 0
      %s1471 = sshll.u32 [#allocation3], 4
      %s1472 = int_to_ptr.vmem [resolvable:$true] %s1471
      %s1473 = sshll.u32 %s7, 4
      %s1474 = int_to_ptr.hbm [resolvable:$true] %s1473
      %1476 = dma.vmem_to_hbm [thread:$0]  %s1472, 16, %s1474, [#allocation4]
    $region33: #{tpu_custom_call.1} parent=1 // pred_fallthru
      _
    // Predicated region
    $region34: #{tpu_custom_call.1} parent=1 // pred_check
      _
    $region35: #{tpu_custom_call.1} parent=1 // pred_check_branch
      %1478 = sbr.rel (0) target = $region37
    $region36: #{tpu_custom_call.1} parent=1 // pred_region
      %1480 = dma.done [#allocation4], 16
    $region37: #{tpu_custom_call.1} parent=1 // pred_fallthru
      _
    %1481 = vsyncpa [#allocation4], 1

</llo_original>
